<compile_context>
chip_gen: v7x
topology: tpu7x:2x2x1
jax: 0.10.0
libtpu: 0.0.40
codegen_flags: <defaults>
</compile_context>

<pallas_src>
import functools

import jax
import jax.numpy as jnp
from jax import lax
from jax.experimental import pallas as pl
from jax.experimental.pallas import tpu as pltpu

TAU = 1.0
NORM_EPS = 1e-12                   # torch F.normalize default eps
_EPS_SQ = NORM_EPS * NORM_EPS      # clamp on squared norm == max(norm, eps) on the norm


def _round_up(x, m):
    return (x + m - 1) // m * m


def _tpu_generation():
    try:
        kind = jax.devices()[0].device_kind.lower()
    except Exception:
        return 6
    for g in (7, 6, 5, 4, 3):
        if f"v{g}" in kind:
            return g
    return 6


def _vmem_capacity_bytes(gen):
    try:
        cap = getattr(pltpu.get_tpu_info(), "vmem_capacity_bytes", None)
        if cap:
            return int(cap)
    except Exception:
        pass
    return (64 << 20) if gen >= 7 else (128 << 20)


# ----------------------------------------------------------------------------
# Pallas kernel: fused (text) normalize + similarity matmul + CE partial sums
# ----------------------------------------------------------------------------
def _retriever_head_kernel(text_ref, formt_ref, part_ref, *maybe_sim_ref,
                           b_true, tau, block_m, use_bf16_exp):
    sim_ref = maybe_sim_ref[0] if maybe_sim_ref else None
    i = pl.program_id(0)
    bp = formt_ref.shape[1]

    # Text-side L2 normalize in f32 (rsqrt -> EUP); the 1/tau scale is folded
    # into the text-side scale (statically skipped when tau == 1.0).
    t = text_ref[...].astype(jnp.float32)                       # (TM, Hp)
    t_scale = lax.rsqrt(jnp.maximum(jnp.sum(t * t, axis=-1, keepdims=True), _EPS_SQ))
    if tau != 1.0:
        t_scale = t_scale * jnp.float32(1.0 / tau)
    t_n = (t * t_scale).astype(jnp.bfloat16)                    # (TM, Hp), incl 1/tau

    # (TM, Hp) x (Hp, Bp) -> (TM, Bp): bf16 operands, f32 accumulation on the
    # MXU.  The RHS is the pre-normalized, pre-transposed formula matrix.
    sim = jnp.dot(t_n, formt_ref[...], preferred_element_type=jnp.float32)

    if sim_ref is not None:
        sim_ref[...] = sim.astype(sim_ref.dtype)

    start = i * block_m
    row_g = start + lax.broadcasted_iota(jnp.int32, (block_m, bp), 0)
    col_g = lax.broadcasted_iota(jnp.int32, (block_m, bp), 1)

    # Diagonal of the *global* sim matrix for this row tile, extracted from the
    # computed `sim` block itself -> bit-identical to the logit in the LSE.
    diag = jnp.sum(jnp.where(row_g == col_g, sim, jnp.float32(0.0)),
                   axis=-1, keepdims=True)                      # (TM, 1)

    # Cross-entropy vs targets = arange(B): per_row = logsumexp(sim_row) - diag.
    sim_l = sim
    if bp != b_true:   # mask padded formula columns out of the logsumexp (f32)
        sim_l = jnp.where(col_g < b_true, sim, jnp.float32(-1e30))
    m = jnp.max(sim_l, axis=-1, keepdims=True)
    z = sim_l - m                                               # f32 max-subtract
    if use_bf16_exp:   # bf16 EUP exp (v6e/v7x); accumulate the sum in f32
        p = jnp.exp(z.astype(jnp.bfloat16))
        s = jnp.sum(p.astype(jnp.float32), axis=-1, keepdims=True)
    else:
        s = jnp.sum(jnp.exp(z), axis=-1, keepdims=True)
    lse = m + jnp.log(s)
    per_row = lse - diag                                        # (TM, 1)
    if bp != b_true:   # mask padded text rows out of the loss sum
        row1 = start + lax.broadcasted_iota(jnp.int32, (block_m, 1), 0)
        per_row = jnp.where(row1 < b_true, per_row, jnp.float32(0.0))

    # Per-tile partial sum, stored lane-dense; the mean is done in the wrapper.
    psum = jnp.sum(per_row, axis=0, keepdims=True)              # (1, 1)
    part_ref[...] = jnp.broadcast_to(psum.reshape(1, 1, 1), part_ref.shape)


def retriever_head(text_embs, formula_embs, *, tau=TAU, return_sim=False,
                   block_m=None):
    """Fused L2-normalize + sim matmul (/tau) + CE(arange) loss."""
    b, h = text_embs.shape
    gen = _tpu_generation()
    hp = _round_up(max(h, 128), 128)

    # Generation-aware row-tile choice (sweep block_m for your shapes).
    if block_m is not None:
        tm = block_m
    elif gen <= 5:                      # v5e: 4x128^2 MXU -> 256 buys nothing
        tm = 128
    elif gen == 6:                      # v6e: big VMEM, amortize per-step cost
        tm = 512 if b >= 1024 else (256 if b >= 512 else 128)
    else:                               # v7x: 64 MiB VMEM, 2 TCs
        tm = 256 if b >= 512 else 128
    bp = _round_up(max(b, tm), tm)
    if block_m is None and gen >= 7 and bp >= 256 and bp // tm < 2:
        tm = bp // 2                    # keep both v7x TensorCores busy
    num_tiles = bp // tm

    # ---- wrapper-side preprocessing (fuses into one XLA pass under jit) ----
    t32 = text_embs.astype(jnp.float32)
    if (bp, hp) != (b, h):
        t32 = jnp.pad(t32, ((0, bp - b), (0, hp - h)))

    # Formula side: normalize once, cast to bf16 once, pad, pre-transpose to
    # (Hp, Bp) so the kernel sees a canonical (K, N) RHS.
    f32 = formula_embs.astype(jnp.float32)
    f_scale = lax.rsqrt(jnp.maximum(jnp.sum(f32 * f32, axis=-1, keepdims=True), _EPS_SQ))
    f_n = (f32 * f_scale).astype(jnp.bfloat16)
    if (bp, hp) != (b, h):
        f_n = jnp.pad(f_n, ((0, bp - b), (0, hp - h)))
    formt = f_n.T                                               # (Hp, Bp) bf16

    out_shape = [jax.ShapeDtypeStruct((num_tiles, 8, 128), jnp.float32)]
    out_specs = [pl.BlockSpec((1, 8, 128), lambda i: (i, 0, 0))]
    if return_sim:
        out_shape.append(jax.ShapeDtypeStruct((bp, bp), jnp.bfloat16))
        out_specs.append(pl.BlockSpec((tm, bp), lambda i: (i, 0)))

    kernel = functools.partial(_retriever_head_kernel, b_true=b, tau=tau,
                               block_m=tm, use_bf16_exp=(gen >= 6))

    # VMEM budget: text tile double-buffered f32, formula resident bf16
    # (budgeted for 2 buffers in case single-buffering is unavailable),
    # outputs, plus headroom; capped at ~0.75x the chip's VMEM capacity.
    vmem_cap = _vmem_capacity_bytes(gen)
    need = (2 * tm * hp * 4 + 2 * hp * bp * 2 + 2 * 8 * 128 * 4
            + (2 * tm * bp * 2 if return_sim else 0))
    vmem_limit = int(min(max(2 * need + (4 << 20), 16 << 20), int(0.75 * vmem_cap)))

    def build(single_buffer_const):
        form_kwargs = {"pipeline_mode": pl.Buffered(1)} if single_buffer_const else {}
        return pl.pallas_call(
            kernel,
            grid=(num_tiles,),
            out_shape=tuple(out_shape),
            in_specs=[
                pl.BlockSpec((tm, hp), lambda i: (i, 0)),       # text row tile
                pl.BlockSpec((hp, bp), lambda i: (0, 0),        # resident formula^T
                             **form_kwargs),
            ],
            out_specs=tuple(out_specs),
            compiler_params=pltpu.CompilerParams(
                dimension_semantics=("parallel",),
                vmem_limit_bytes=vmem_limit),
        )

    try:
        results = build(True)(t32, formt)      # single-buffered constant RHS
    except Exception:
        results = build(False)(t32, formt)     # fallback: default buffering

    partials = results[0]
    loss = jnp.sum(partials[:, 0, 0]) / jnp.float32(b)
    if return_sim:
        return loss, results[1][:b, :b].astype(jnp.float32)
    return loss


# ----------------------------------------------------------------------------
# Synthetic encoder (plain-JAX glue; stands in for AutoModel.from_pretrained)
# ----------------------------------------------------------------------------
# TODO(synk): pretrained HuggingFace AutoModel encoder has no in-script
# equivalent; replaced by a deterministic synthetic single-layer transformer
# producing last_hidden_state with the same interface.
def _layer_norm(x, eps=1e-5):
    mu = jnp.mean(x, axis=-1, keepdims=True)
    var = jnp.mean((x - mu) ** 2, axis=-1, keepdims=True)
    return (x - mu) * lax.rsqrt(var + eps)


def synthetic_encoder(params, input_ids, attention_mask):
    h = params["hidden"]
    x = params["word_emb"][input_ids] + params["pos_emb"][None, :, :]   # (B,S,H)
    q = x @ params["wq"]
    k = x @ params["wk"]
    v = x @ params["wv"]
    scores = jnp.einsum("bqd,bkd->bqk", q, k) / jnp.sqrt(jnp.float32(h))
    mask = attention_mask[:, None, :]                                   # (B,1,S)
    scores = jnp.where(mask > 0, scores, jnp.float32(-1e9))
    attn = jax.nn.softmax(scores, axis=-1)
    ctx = jnp.einsum("bqk,bkd->bqd", attn, v) @ params["wo"]
    x = _layer_norm(x + ctx)
    ff = jax.nn.gelu(x @ params["w1"]) @ params["w2"]
    x = _layer_norm(x + ff)
    return x  # last_hidden_state (B, S, H)


def init_params(key, vocab_size, hidden, n_formula, seq_len):
    ks = jax.random.split(key, 9)
    s = 0.02
    formula_emb = jax.random.normal(ks[8], (n_formula, hidden), jnp.float32)
    # nn.Embedding(..., padding_idx=-1): last row is the padding embedding (zeros)
    formula_emb = formula_emb.at[-1].set(0.0)
    return dict(
        hidden=hidden,
        word_emb=s * jax.random.normal(ks[0], (vocab_size, hidden), jnp.float32),
        pos_emb=s * jax.random.normal(ks[1], (seq_len, hidden), jnp.float32),
        wq=s * jax.random.normal(ks[2], (hidden, hidden), jnp.float32),
        wk=s * jax.random.normal(ks[3], (hidden, hidden), jnp.float32),
        wv=s * jax.random.normal(ks[4], (hidden, hidden), jnp.float32),
        wo=s * jax.random.normal(ks[5], (hidden, hidden), jnp.float32),
        w1=s * jax.random.normal(ks[6], (hidden, 4 * hidden), jnp.float32),
        w2=s * jax.random.normal(ks[7], (4 * hidden, hidden), jnp.float32),
        formula_emb=formula_emb,
    )


# ----------------------------------------------------------------------------
# FormulaRetriever.forward
# ----------------------------------------------------------------------------
def formula_retriever_forward(params, input_ids, attention_mask, labels):
    last_hidden = synthetic_encoder(params, input_ids, attention_mask)  # (B,S,H)
    text_embs = last_hidden[:, 0, :]                                    # CLS token
    formula_embs = jnp.take(params["formula_emb"], labels, axis=0)      # (B,H)
    # Like the PyTorch module, forward only needs the loss -> the (B,B) sim
    # matrix is never materialized / written back to HBM on this path.
    loss = retriever_head(text_embs, formula_embs, return_sim=False)
    return {"loss": loss, "text_embs": text_embs, "formula_embs": formula_embs}


# ----------------------------------------------------------------------------
# Pure-JAX reference (f32 matmul) for correctness checks
# ----------------------------------------------------------------------------
def _reference_head(text_embs, formula_embs, tau=TAU):
    t = text_embs / jnp.maximum(
        jnp.linalg.norm(text_embs, axis=1, keepdims=True), NORM_EPS)
    f = formula_embs / jnp.maximum(
        jnp.linalg.norm(formula_embs, axis=1, keepdims=True), NORM_EPS)
    sim = (t @ f.T) / tau
    logp = jax.nn.log_softmax(sim, axis=-1)
    idx = jnp.arange(sim.shape[0])
    return -jnp.mean(logp[idx, idx]), sim


if __name__ == "__main__":
    B, S, H, V, NF = 2, 8, 32, 64, 16
    key = jax.random.PRNGKey(0)
    kp, ki, km, kl = jax.random.split(key, 4)

    params = init_params(kp, vocab_size=V, hidden=H, n_formula=NF, seq_len=S)
    input_ids = jax.random.randint(ki, (B, S), 0, V, dtype=jnp.int32)
    attention_mask = jnp.concatenate(
        [jnp.ones((B, S - 2), jnp.int32), jnp.zeros((B, 2), jnp.int32)], axis=1)
    labels = jax.random.randint(kl, (B,), 0, NF, dtype=jnp.int32)

    out = formula_retriever_forward(params, input_ids, attention_mask, labels)
    loss = jax.block_until_ready(out["loss"])

    ref_loss, ref_sim = _reference_head(out["text_embs"], out["formula_embs"])
    # Tolerances are relaxed vs a pure-f32 kernel because the similarity
    # matmul runs with bf16 MXU operands (f32 accumulation) and the softmax
    # exp may run in bf16 on v6e/v7x.
    assert jnp.isfinite(loss), "loss is not finite"
    assert jnp.allclose(loss, ref_loss, atol=2e-2, rtol=2e-2), (loss, ref_loss)

    # Also exercise the sim-materializing (eval / pred-style) path.
    loss2, sim = retriever_head(out["text_embs"], out["formula_embs"],
                                return_sim=True)
    sim = jax.block_until_ready(sim)
    assert jnp.allclose(sim, ref_sim, atol=2e-2, rtol=2e-2), (sim, ref_sim)
    assert jnp.allclose(loss2, ref_loss, atol=2e-2, rtol=2e-2), (loss2, ref_loss)

    print("KERNEL_OK")
</pallas_src>

<mosaic_0001>
module attributes {stable_mosaic.version = 11 : i64} {
  func.func @_retriever_head_kernel(%arg0: i32, %arg1: memref<128x128xf32, #tpu.memory_space<vmem>>, %arg2: memref<128x128xbf16, #tpu.memory_space<vmem>>, %arg3: memref<1x8x128xf32, #tpu.memory_space<vmem>>) attributes {dimension_semantics = [#tpu.dimension_semantics<parallel>], iteration_bounds = array<i64: 1>, scalar_prefetch = 0 : i64, scratch_operands = 0 : i64, tpu.core_type = #tpu.core_type<tc>, window_params = [{transform_indices = @transform_0, window_bounds = array<i64: 128, 128>}, {pipeline_mode = #tpu.pipeline_mode<synchronous>, transform_indices = @transform_1, window_bounds = array<i64: 128, 128>}, {transform_indices = @transform_2, window_bounds = array<i64: 1, 8, 128>}]} {
    %c0 = arith.constant 0 : index
    %c0_0 = arith.constant 0 : index
    %0 = vector.load %arg1[%c0, %c0_0] : memref<128x128xf32, #tpu.memory_space<vmem>>, vector<128x128xf32>
    %1 = arith.mulf %0, %0 : vector<128x128xf32>
    %cst = arith.constant dense<0.000000e+00> : vector<128xf32>
    %2 = vector.multi_reduction <add>, %1, %cst [1] : vector<128x128xf32> to vector<128xf32>
    %3 = vector.shape_cast %2 : vector<128xf32> to vector<128x1xf32>
    %cst_1 = arith.constant 1.000000e-24 : f32
    %4 = vector.broadcast %cst_1 : f32 to vector<128x1xf32>
    %5 = arith.maximumf %3, %4 : vector<128x1xf32>
    %6 = math.rsqrt %5 : vector<128x1xf32>
    %7 = vector.broadcast %6 : vector<128x1xf32> to vector<128x128xf32>
    %8 = arith.mulf %0, %7 : vector<128x128xf32>
    %9 = arith.truncf %8 : vector<128x128xf32> to vector<128x128xbf16>
    %c0_2 = arith.constant 0 : index
    %c0_3 = arith.constant 0 : index
    %10 = vector.load %arg2[%c0_2, %c0_3] : memref<128x128xbf16, #tpu.memory_space<vmem>>, vector<128x128xbf16>
    %cst_4 = arith.constant dense<0.000000e+00> : vector<128x128xf32>
    %11 = tpu.matmul %9, %10, %cst_4 {dimension_numbers = #tpu.dot_dimension_numbers<[1], [0], [0], [1], [0, 0, 1, 1], [], []>} : vector<128x128xbf16>, vector<128x128xbf16>, vector<128x128xf32> -> vector<128x128xf32>
    %c128_i32 = arith.constant 128 : i32
    %12 = arith.muli %arg0, %c128_i32 : i32
    %13 = tpu.iota {dimensions = array<i32: 0>} : vector<128x128xi32>
    %14 = vector.broadcast %12 : i32 to vector<128x128xi32>
    %15 = arith.addi %14, %13 : vector<128x128xi32>
    %16 = tpu.iota {dimensions = array<i32: 1>} : vector<128x128xi32>
    %17 = arith.cmpi eq, %15, %16 : vector<128x128xi32>
    %cst_5 = arith.constant 0.000000e+00 : f32
    %18 = vector.broadcast %cst_5 : f32 to vector<128x128xf32>
    %19 = arith.select %17, %11, %18 : vector<128x128xi1>, vector<128x128xf32>
    %cst_6 = arith.constant dense<0.000000e+00> : vector<128xf32>
    %20 = vector.multi_reduction <add>, %19, %cst_6 [1] : vector<128x128xf32> to vector<128xf32>
    %21 = vector.shape_cast %20 : vector<128xf32> to vector<128x1xf32>
    %c2_i32 = arith.constant 2 : i32
    %22 = vector.broadcast %c2_i32 : i32 to vector<128x128xi32>
    %23 = arith.cmpi slt, %16, %22 : vector<128x128xi32>
    %cst_7 = arith.constant -1.000000e+30 : f32
    %24 = vector.broadcast %cst_7 : f32 to vector<128x128xf32>
    %25 = arith.select %23, %11, %24 : vector<128x128xi1>, vector<128x128xf32>
    %cst_8 = arith.constant dense<0xFF800000> : vector<128xf32>
    %26 = vector.multi_reduction <maximumf>, %25, %cst_8 [1] : vector<128x128xf32> to vector<128xf32>
    %27 = vector.shape_cast %26 : vector<128xf32> to vector<128x1xf32>
    %28 = vector.broadcast %27 : vector<128x1xf32> to vector<128x128xf32>
    %29 = arith.subf %25, %28 : vector<128x128xf32>
    %30 = arith.truncf %29 : vector<128x128xf32> to vector<128x128xbf16>
    %31 = math.exp %30 : vector<128x128xbf16>
    %32 = arith.extf %31 : vector<128x128xbf16> to vector<128x128xf32>
    %cst_9 = arith.constant dense<0.000000e+00> : vector<128xf32>
    %33 = vector.multi_reduction <add>, %32, %cst_9 [1] : vector<128x128xf32> to vector<128xf32>
    %34 = vector.shape_cast %33 : vector<128xf32> to vector<128x1xf32>
    %35 = math.log %34 : vector<128x1xf32>
    %36 = arith.addf %27, %35 : vector<128x1xf32>
    %37 = arith.subf %36, %21 : vector<128x1xf32>
    %38 = tpu.iota {dimensions = array<i32: 0>} : vector<128x1xi32>
    %39 = vector.broadcast %12 : i32 to vector<128x1xi32>
    %40 = arith.addi %39, %38 : vector<128x1xi32>
    %c2_i32_10 = arith.constant 2 : i32
    %41 = vector.broadcast %c2_i32_10 : i32 to vector<128x1xi32>
    %42 = arith.cmpi slt, %40, %41 : vector<128x1xi32>
    %cst_11 = arith.constant 0.000000e+00 : f32
    %43 = vector.broadcast %cst_11 : f32 to vector<128x1xf32>
    %44 = arith.select %42, %37, %43 : vector<128x1xi1>, vector<128x1xf32>
    %cst_12 = arith.constant dense<0.000000e+00> : vector<1xf32>
    %45 = vector.multi_reduction <add>, %44, %cst_12 [0] : vector<128x1xf32> to vector<1xf32>
    %46 = vector.shape_cast %45 : vector<1xf32> to vector<1x1xf32>
    %47 = vector.shape_cast %46 : vector<1x1xf32> to vector<1x1x1xf32>
    %48 = vector.shape_cast %47 : vector<1x1x1xf32> to vector<1x1x1xf32>
    %49 = vector.broadcast %48 : vector<1x1x1xf32> to vector<1x8x128xf32>
    %c0_13 = arith.constant 0 : index
    %c0_14 = arith.constant 0 : index
    %c0_15 = arith.constant 0 : index
    %50 = vector.load %arg3[%c0_13, %c0_14, %c0_15] : memref<1x8x128xf32, #tpu.memory_space<vmem>>, vector<1x8x128xf32>
    tpu.vector_store %arg3[%c0_13, %c0_14, %c0_15], %49 {strides = array<i32>} : memref<1x8x128xf32, #tpu.memory_space<vmem>>, vector<1x8x128xf32>,
    return
  }
  func.func @transform_0(%arg0: i32) -> (i32, i32) {
    %c0_i32 = arith.constant 0 : i32
    %c0_i32_0 = arith.constant 0 : i32
    return %arg0, %c0_i32 : i32, i32
  }
  func.func @transform_1(%arg0: i32) -> (i32, i32) {
    %c0_i32 = arith.constant 0 : i32
    %c0_i32_0 = arith.constant 0 : i32
    %c0_i32_1 = arith.constant 0 : i32
    return %c0_i32, %c0_i32_0 : i32, i32
  }
  func.func @transform_2(%arg0: i32) -> (i32, i32, i32) {
    %c0_i32 = arith.constant 0 : i32
    %c0_i32_0 = arith.constant 0 : i32
    %c0_i32_1 = arith.constant 0 : i32
    return %arg0, %c0_i32, %c0_i32_0 : i32, i32, i32
  }
}

module attributes {stable_mosaic.version = 11 : i64} {
  func.func @_retriever_head_kernel(%arg0: i32, %arg1: memref<128x128xf32, #tpu.memory_space<vmem>>, %arg2: memref<128x128xbf16, #tpu.memory_space<vmem>>, %arg3: memref<1x8x128xf32, #tpu.memory_space<vmem>>) attributes {dimension_semantics = [#tpu.dimension_semantics<parallel>], iteration_bounds = array<i64: 1>, scalar_prefetch = 0 : i64, scratch_operands = 0 : i64, tpu.core_type = #tpu.core_type<tc>, window_params = [{transform_indices = @transform_0, window_bounds = array<i64: 128, 128>}, {pipeline_mode = #tpu.pipeline_mode<synchronous>, transform_indices = @transform_1, window_bounds = array<i64: 128, 128>}, {transform_indices = @transform_2, window_bounds = array<i64: 1, 8, 128>}]} {
    %c0 = arith.constant 0 : index
    %c0_0 = arith.constant 0 : index
    %0 = vector.load %arg1[%c0, %c0_0] : memref<128x128xf32, #tpu.memory_space<vmem>>, vector<128x128xf32>
    %1 = arith.mulf %0, %0 : vector<128x128xf32>
    %cst = arith.constant dense<0.000000e+00> : vector<128xf32>
    %2 = vector.multi_reduction <add>, %1, %cst [1] : vector<128x128xf32> to vector<128xf32>
    %3 = vector.shape_cast %2 : vector<128xf32> to vector<128x1xf32>
    %cst_1 = arith.constant 1.000000e-24 : f32
    %4 = vector.broadcast %cst_1 : f32 to vector<128x1xf32>
    %5 = arith.maximumf %3, %4 : vector<128x1xf32>
    %6 = math.rsqrt %5 : vector<128x1xf32>
    %7 = vector.broadcast %6 : vector<128x1xf32> to vector<128x128xf32>
    %8 = arith.mulf %0, %7 : vector<128x128xf32>
    %9 = arith.truncf %8 : vector<128x128xf32> to vector<128x128xbf16>
    %c0_2 = arith.constant 0 : index
    %c0_3 = arith.constant 0 : index
    %10 = vector.load %arg2[%c0_2, %c0_3] : memref<128x128xbf16, #tpu.memory_space<vmem>>, vector<128x128xbf16>
    %cst_4 = arith.constant dense<0.000000e+00> : vector<128x128xf32>
    %11 = tpu.matmul %9, %10, %cst_4 {dimension_numbers = #tpu.dot_dimension_numbers<[1], [0], [0], [1], [0, 0, 1, 1], [], []>} : vector<128x128xbf16>, vector<128x128xbf16>, vector<128x128xf32> -> vector<128x128xf32>
    %c128_i32 = arith.constant 128 : i32
    %12 = arith.muli %arg0, %c128_i32 : i32
    %13 = tpu.iota {dimensions = array<i32: 0>} : vector<128x128xi32>
    %14 = vector.broadcast %12 : i32 to vector<128x128xi32>
    %15 = arith.addi %14, %13 : vector<128x128xi32>
    %16 = tpu.iota {dimensions = array<i32: 1>} : vector<128x128xi32>
    %17 = arith.cmpi eq, %15, %16 : vector<128x128xi32>
    %cst_5 = arith.constant 0.000000e+00 : f32
    %18 = vector.broadcast %cst_5 : f32 to vector<128x128xf32>
    %19 = arith.select %17, %11, %18 : vector<128x128xi1>, vector<128x128xf32>
    %cst_6 = arith.constant dense<0.000000e+00> : vector<128xf32>
    %20 = vector.multi_reduction <add>, %19, %cst_6 [1] : vector<128x128xf32> to vector<128xf32>
    %21 = vector.shape_cast %20 : vector<128xf32> to vector<128x1xf32>
    %c2_i32 = arith.constant 2 : i32
    %22 = vector.broadcast %c2_i32 : i32 to vector<128x128xi32>
    %23 = arith.cmpi slt, %16, %22 : vector<128x128xi32>
    %cst_7 = arith.constant -1.000000e+30 : f32
    %24 = vector.broadcast %cst_7 : f32 to vector<128x128xf32>
    %25 = arith.select %23, %11, %24 : vector<128x128xi1>, vector<128x128xf32>
    %cst_8 = arith.constant dense<0xFF800000> : vector<128xf32>
    %26 = vector.multi_reduction <maximumf>, %25, %cst_8 [1] : vector<128x128xf32> to vector<128xf32>
    %27 = vector.shape_cast %26 : vector<128xf32> to vector<128x1xf32>
    %28 = vector.broadcast %27 : vector<128x1xf32> to vector<128x128xf32>
    %29 = arith.subf %25, %28 : vector<128x128xf32>
    %30 = arith.truncf %29 : vector<128x128xf32> to vector<128x128xbf16>
    %31 = math.exp %30 : vector<128x128xbf16>
    %32 = arith.extf %31 : vector<128x128xbf16> to vector<128x128xf32>
    %cst_9 = arith.constant dense<0.000000e+00> : vector<128xf32>
    %33 = vector.multi_reduction <add>, %32, %cst_9 [1] : vector<128x128xf32> to vector<128xf32>
    %34 = vector.shape_cast %33 : vector<128xf32> to vector<128x1xf32>
    %35 = math.log %34 : vector<128x1xf32>
    %36 = arith.addf %27, %35 : vector<128x1xf32>
    %37 = arith.subf %36, %21 : vector<128x1xf32>
    %38 = tpu.iota {dimensions = array<i32: 0>} : vector<128x1xi32>
    %39 = vector.broadcast %12 : i32 to vector<128x1xi32>
    %40 = arith.addi %39, %38 : vector<128x1xi32>
    %c2_i32_10 = arith.constant 2 : i32
    %41 = vector.broadcast %c2_i32_10 : i32 to vector<128x1xi32>
    %42 = arith.cmpi slt, %40, %41 : vector<128x1xi32>
    %cst_11 = arith.constant 0.000000e+00 : f32
    %43 = vector.broadcast %cst_11 : f32 to vector<128x1xf32>
    %44 = arith.select %42, %37, %43 : vector<128x1xi1>, vector<128x1xf32>
    %cst_12 = arith.constant dense<0.000000e+00> : vector<1xf32>
    %45 = vector.multi_reduction <add>, %44, %cst_12 [0] : vector<128x1xf32> to vector<1xf32>
    %46 = vector.shape_cast %45 : vector<1xf32> to vector<1x1xf32>
    %47 = vector.shape_cast %46 : vector<1x1xf32> to vector<1x1x1xf32>
    %48 = vector.shape_cast %47 : vector<1x1x1xf32> to vector<1x1x1xf32>
    %49 = vector.broadcast %48 : vector<1x1x1xf32> to vector<1x8x128xf32>
    %c0_13 = arith.constant 0 : index
    %c0_14 = arith.constant 0 : index
    %c0_15 = arith.constant 0 : index
    %50 = vector.load %arg3[%c0_13, %c0_14, %c0_15] : memref<1x8x128xf32, #tpu.memory_space<vmem>>, vector<1x8x128xf32>
    tpu.vector_store %arg3[%c0_13, %c0_14, %c0_15], %49 {strides = array<i32>} : memref<1x8x128xf32, #tpu.memory_space<vmem>>, vector<1x8x128xf32>,
    return
  }
  func.func @transform_0(%arg0: i32) -> (i32, i32) {
    %c0_i32 = arith.constant 0 : i32
    %c0_i32_0 = arith.constant 0 : i32
    return %arg0, %c0_i32 : i32, i32
  }
  func.func @transform_1(%arg0: i32) -> (i32, i32) {
    %c0_i32 = arith.constant 0 : i32
    %c0_i32_0 = arith.constant 0 : i32
    %c0_i32_1 = arith.constant 0 : i32
    return %c0_i32, %c0_i32_0 : i32, i32
  }
  func.func @transform_2(%arg0: i32) -> (i32, i32, i32) {
    %c0_i32 = arith.constant 0 : i32
    %c0_i32_0 = arith.constant 0 : i32
    %c0_i32_1 = arith.constant 0 : i32
    return %arg0, %c0_i32, %c0_i32_0 : i32, i32, i32
  }
}

</mosaic_0001>

<llo_original>
// kernel: tpu_custom_call.1
$region0: #{tpu_custom_call.1}
  #allocation0 [shape = 'u32[]', space=smem, size = 0x4, offset = 0x4, fixed_abs, tag = 'smem constant byte address 0x4 - core index']
  #allocation1 [shape = 'u32[144,128]{1,0:T(1,128)}', space=vmem, size = 0x12000, scoped, tag = 'internal scratch']
  %s0 = inlined_call_operand.hbm [shape: f32[128,128], index: 0, kind: input, shape index: {}]
  %s1 = inlined_call_operand.hbm [shape: bf16[128,128], index: 1, kind: input, shape index: {}]
  %s2 = inlined_call_operand.hbm [shape: f32[1,8,128], index: 2, kind: output, shape index: {}]
  %s3 = sld [smem:[#allocation0]]
  $region26: #{tpu_custom_call.1} parent=0
    _
  %s5 = ssub.s32 1, %s3
  %s6 = scalar_select 0, %s5, %s3
  $region1: #{tpu_custom_call.1} parent=0
    #allocation2 [shape = 'u8[65536]{0}', space=vmem, size = 0x10000, scoped, tag = 'input window, operand 0, single buffered']
    #allocation3 [shape = 's32[1]{0}', space=sflag, size = 0x4, scoped, tag = 'scoped memory for tpu_custom_call.1']
    #allocation4 [shape = 's32[1]{0}', space=sflag, size = 0x4, scoped, tag = 'scoped memory for tpu_custom_call.1']
    #allocation5 [shape = 'u8[32768]{0}', space=vmem, size = 0x8000, scoped, tag = 'input window, operand 1, single buffered']
    #allocation6 [shape = 's32[1]{0}', space=sflag, size = 0x4, scoped, tag = 'scoped memory for tpu_custom_call.1']
    #allocation7 [shape = 'u8[4096]{0}', space=vmem, size = 0x1000, scoped, tag = 'output window, operand 0, single buffered']
    %7 = vsyncpa [#allocation3], 0
    %8 = vsyncpa [#allocation6], 0
    %9 = vsyncpa [#allocation4], 0
    // Predicated region
    $region2: #{tpu_custom_call.1} parent=1 // pred_check
      _
    $region3: #{tpu_custom_call.1} parent=1 // pred_check_branch
      %11 = sbr.rel (0) target = $region5
    $region4: #{tpu_custom_call.1} parent=1 // pred_region
      %s13 = ssub.s32 2048, 2048
      %14 = vsyncadd [#allocation3], %s13
      %s15 = sshll.u32 [#allocation2], 4
      %s16 = int_to_ptr.vmem [resolvable:$true] %s15
      %21 = dma.hbm_to_vmem [thread:$0]  %s0, 2048, %s16, [#allocation3], 128, 128, 8
    $region5: #{tpu_custom_call.1} parent=1 // pred_fallthru
      _
    // Predicated region
    $region6: #{tpu_custom_call.1} parent=1 // pred_check
      _
    $region7: #{tpu_custom_call.1} parent=1 // pred_check_branch
      %23 = sbr.rel (0) target = $region9
    $region8: #{tpu_custom_call.1} parent=1 // pred_region
      %s25 = ssub.s32 1024, 1024
      %26 = vsyncadd [#allocation6], %s25
      %s27 = sshll.u32 [#allocation5], 4
      %s28 = int_to_ptr.vmem [resolvable:$true] %s27
      %33 = dma.hbm_to_vmem [thread:$0]  %s1, 1024, %s28, [#allocation6], 64, 64, 4
    $region9: #{tpu_custom_call.1} parent=1 // pred_fallthru
      _
    // Predicated region
    $region10: #{tpu_custom_call.1} parent=1 // pred_check
      _
    $region11: #{tpu_custom_call.1} parent=1 // pred_check_branch
      %35 = sbr.rel (0) target = $region13
    $region12: #{tpu_custom_call.1} parent=1 // pred_region
      %36 = dma.done [#allocation3], 2048
    $region13: #{tpu_custom_call.1} parent=1 // pred_fallthru
      _
    // Predicated region
    $region14: #{tpu_custom_call.1} parent=1 // pred_check
      _
    $region15: #{tpu_custom_call.1} parent=1 // pred_check_branch
      %38 = sbr.rel (0) target = $region17
    $region16: #{tpu_custom_call.1} parent=1 // pred_region
      %39 = dma.done [#allocation6], 1024
    $region17: #{tpu_custom_call.1} parent=1 // pred_fallthru
      _
    %v41 = vld [vmem:[#allocation2] sm:$0xff]
    %v42 = vld [vmem:[#allocation2 + $0x8] sm:$0xff]
    %v43 = vld [vmem:[#allocation2 + $0x10] sm:$0xff]
    %v44 = vld [vmem:[#allocation2 + $0x18] sm:$0xff]
    %v45 = vld [vmem:[#allocation2 + $0x20] sm:$0xff]
    %v46 = vld [vmem:[#allocation2 + $0x28] sm:$0xff]
    %v47 = vld [vmem:[#allocation2 + $0x30] sm:$0xff]
    %v48 = vld [vmem:[#allocation2 + $0x38] sm:$0xff]
    %v49 = vld [vmem:[#allocation2 + $0x40] sm:$0xff]
    %v50 = vld [vmem:[#allocation2 + $0x48] sm:$0xff]
    %v51 = vld [vmem:[#allocation2 + $0x50] sm:$0xff]
    %v52 = vld [vmem:[#allocation2 + $0x58] sm:$0xff]
    %v53 = vld [vmem:[#allocation2 + $0x60] sm:$0xff]
    %v54 = vld [vmem:[#allocation2 + $0x68] sm:$0xff]
    %v55 = vld [vmem:[#allocation2 + $0x70] sm:$0xff]
    %v56 = vld [vmem:[#allocation2 + $0x78] sm:$0xff]
    %v57 = vmul.f32 %v41, %v41
    %v58 = vmul.f32 %v42, %v42
    %v59 = vmul.f32 %v43, %v43
    %v60 = vmul.f32 %v44, %v44
    %v61 = vmul.f32 %v45, %v45
    %v62 = vmul.f32 %v46, %v46
    %v63 = vmul.f32 %v47, %v47
    %v64 = vmul.f32 %v48, %v48
    %v65 = vmul.f32 %v49, %v49
    %v66 = vmul.f32 %v50, %v50
    %v67 = vmul.f32 %v51, %v51
    %v68 = vmul.f32 %v52, %v52
    %v69 = vmul.f32 %v53, %v53
    %v70 = vmul.f32 %v54, %v54
    %v71 = vmul.f32 %v55, %v55
    %v72 = vmul.f32 %v56, %v56
    %73 = vadd.xlane.f32.xlu0 %v57
    %v74 = vpop.xlane.xlu0 %73
    %75 = vadd.xlane.f32.xlu0 %v58
    %v76 = vpop.xlane.xlu0 %75
    %77 = vadd.xlane.f32.xlu0 %v59
    %v78 = vpop.xlane.xlu0 %77
    %79 = vadd.xlane.f32.xlu0 %v60
    %v80 = vpop.xlane.xlu0 %79
    %81 = vadd.xlane.f32.xlu0 %v61
    %v82 = vpop.xlane.xlu0 %81
    %83 = vadd.xlane.f32.xlu0 %v62
    %v84 = vpop.xlane.xlu0 %83
    %85 = vadd.xlane.f32.xlu0 %v63
    %v86 = vpop.xlane.xlu0 %85
    %87 = vadd.xlane.f32.xlu0 %v64
    %v88 = vpop.xlane.xlu0 %87
    %89 = vadd.xlane.f32.xlu0 %v65
    %v90 = vpop.xlane.xlu0 %89
    %91 = vadd.xlane.f32.xlu0 %v66
    %v92 = vpop.xlane.xlu0 %91
    %93 = vadd.xlane.f32.xlu0 %v67
    %v94 = vpop.xlane.xlu0 %93
    %95 = vadd.xlane.f32.xlu0 %v68
    %v96 = vpop.xlane.xlu0 %95
    %97 = vadd.xlane.f32.xlu0 %v69
    %v98 = vpop.xlane.xlu0 %97
    %99 = vadd.xlane.f32.xlu0 %v70
    %v100 = vpop.xlane.xlu0 %99
    %101 = vadd.xlane.f32.xlu0 %v71
    %v102 = vpop.xlane.xlu0 %101
    %103 = vadd.xlane.f32.xlu0 %v72
    %v104 = vpop.xlane.xlu0 %103
    %v105 = vmax.f32 %v74, 1e-24
    %v106 = vmax.f32 %v76, 1e-24
    %v107 = vmax.f32 %v78, 1e-24
    %v108 = vmax.f32 %v80, 1e-24
    %v109 = vmax.f32 %v82, 1e-24
    %v110 = vmax.f32 %v84, 1e-24
    %v111 = vmax.f32 %v86, 1e-24
    %v112 = vmax.f32 %v88, 1e-24
    %v113 = vmax.f32 %v90, 1e-24
    %v114 = vmax.f32 %v92, 1e-24
    %v115 = vmax.f32 %v94, 1e-24
    %v116 = vmax.f32 %v96, 1e-24
    %v117 = vmax.f32 %v98, 1e-24
    %v118 = vmax.f32 %v100, 1e-24
    %v119 = vmax.f32 %v102, 1e-24
    %v120 = vmax.f32 %v104, 1e-24
    %v121 = vrsqrt.pop %v105
    %v122 = vrsqrt.pop %v106
    %v123 = vrsqrt.pop %v107
    %v124 = vrsqrt.pop %v108
    %v125 = vrsqrt.pop %v109
    %v126 = vrsqrt.pop %v110
    %v127 = vrsqrt.pop %v111
    %v128 = vrsqrt.pop %v112
    %v129 = vrsqrt.pop %v113
    %v130 = vrsqrt.pop %v114
    %v131 = vrsqrt.pop %v115
    %v132 = vrsqrt.pop %v116
    %v133 = vrsqrt.pop %v117
    %v134 = vrsqrt.pop %v118
    %v135 = vrsqrt.pop %v119
    %v136 = vrsqrt.pop %v120
    %v137 = vmul.f32 %v41, %v121
    %v138 = vmul.f32 %v42, %v122
    %v139 = vmul.f32 %v43, %v123
    %v140 = vmul.f32 %v44, %v124
    %v141 = vmul.f32 %v45, %v125
    %v142 = vmul.f32 %v46, %v126
    %v143 = vmul.f32 %v47, %v127
    %v144 = vmul.f32 %v48, %v128
    %v145 = vmul.f32 %v49, %v129
    %v146 = vmul.f32 %v50, %v130
    %v147 = vmul.f32 %v51, %v131
    %v148 = vmul.f32 %v52, %v132
    %v149 = vmul.f32 %v53, %v133
    %v150 = vmul.f32 %v54, %v134
    %v151 = vmul.f32 %v55, %v135
    %v152 = vmul.f32 %v56, %v136
    %v153 = vpack.c.bf16 %v138, %v137
    %v154 = vpack.c.bf16 %v140, %v139
    %v155 = vpack.c.bf16 %v142, %v141
    %v156 = vpack.c.bf16 %v144, %v143
    %v157 = vpack.c.bf16 %v146, %v145
    %v158 = vpack.c.bf16 %v148, %v147
    %v159 = vpack.c.bf16 %v150, %v149
    %v160 = vpack.c.bf16 %v152, %v151
    %v161 = vld [vmem:[#allocation5] sm:$0xf]
    %v162 = vld [vmem:[#allocation5 + $0x4] sm:$0xf]
    %v163 = vld [vmem:[#allocation5 + $0x8] sm:$0xf]
    %v164 = vld [vmem:[#allocation5 + $0xc] sm:$0xf]
    %v165 = vld [vmem:[#allocation5 + $0x10] sm:$0xf]
    %v166 = vld [vmem:[#allocation5 + $0x14] sm:$0xf]
    %v167 = vld [vmem:[#allocation5 + $0x18] sm:$0xf]
    %v168 = vld [vmem:[#allocation5 + $0x1c] sm:$0xf]
    %v169 = vld [vmem:[#allocation5 + $0x20] sm:$0xf]
    %v170 = vld [vmem:[#allocation5 + $0x24] sm:$0xf]
    %v171 = vld [vmem:[#allocation5 + $0x28] sm:$0xf]
    %v172 = vld [vmem:[#allocation5 + $0x2c] sm:$0xf]
    %v173 = vld [vmem:[#allocation5 + $0x30] sm:$0xf]
    %v174 = vld [vmem:[#allocation5 + $0x34] sm:$0xf]
    %v175 = vld [vmem:[#allocation5 + $0x38] sm:$0xf]
    %v176 = vld [vmem:[#allocation5 + $0x3c] sm:$0xf]
    %v193 = vunpack.c.l.b16 %v161
    %v194 = vunpack.c.l.b16 %v162
    %v195 = vunpack.c.l.b16 %v163
    %v196 = vunpack.c.l.b16 %v164
    %v197 = vunpack.c.l.b16 %v165
    %v198 = vunpack.c.l.b16 %v166
    %v199 = vunpack.c.l.b16 %v167
    %v200 = vunpack.c.l.b16 %v168
    %v201 = vunpack.c.l.b16 %v169
    %v202 = vunpack.c.l.b16 %v170
    %v203 = vunpack.c.l.b16 %v171
    %v204 = vunpack.c.l.b16 %v172
    %v205 = vunpack.c.l.b16 %v173
    %v206 = vunpack.c.l.b16 %v174
    %v207 = vunpack.c.l.b16 %v175
    %v208 = vunpack.c.l.b16 %v176
    %v209 = vpack.c.b16 %v194, %v193
    %v210 = vpack.c.b16 %v196, %v195
    %v211 = vpack.c.b16 %v198, %v197
    %v212 = vpack.c.b16 %v200, %v199
    %v213 = vpack.c.b16 %v202, %v201
    %v214 = vpack.c.b16 %v204, %v203
    %v215 = vpack.c.b16 %v206, %v205
    %v216 = vpack.c.b16 %v208, %v207
    %225 = vmatprep.subr.bf16.mxu0 0
    %226 = vmatpush1.bf16.msra.mxu0 %v209
    %227 = vmatprep.subr.bf16.mxu0 0
    %228 = vmatpush1.bf16.msra.mxu0 %v210
    %229 = vmatprep.subr.bf16.mxu0 0
    %230 = vmatpush1.bf16.msra.mxu0 %v211
    %231 = vmatprep.subr.bf16.mxu0 0
    %232 = vmatpush1.bf16.msra.mxu0 %v212
    %233 = vmatprep.subr.bf16.mxu0 0
    %234 = vmatpush1.bf16.msra.mxu0 %v213
    %235 = vmatprep.subr.bf16.mxu0 0
    %236 = vmatpush1.bf16.msra.mxu0 %v214
    %237 = vmatprep.subr.bf16.mxu0 0
    %238 = vmatpush1.bf16.msra.mxu0 %v215
    %239 = vmatprep.subr.bf16.mxu0 0
    %240 = vmatpush1.bf16.msra.mxu0 %v216
    %241 = vmatprep.subr.bf16.mxu0 0
    %242 = vmatpush1.bf16.msra.mxu0 0
    %243 = vmatprep.subr.bf16.mxu0 0
    %244 = vmatpush1.bf16.msra.mxu0 0
    %245 = vmatprep.subr.bf16.mxu0 0
    %246 = vmatpush1.bf16.msra.mxu0 0
    %247 = vmatprep.subr.bf16.mxu0 0
    %248 = vmatpush1.bf16.msra.mxu0 0
    %249 = vmatprep.subr.bf16.mxu0 0
    %250 = vmatpush1.bf16.msra.mxu0 0
    %251 = vmatprep.subr.bf16.mxu0 0
    %252 = vmatpush1.bf16.msra.mxu0 0
    %253 = vmatprep.subr.bf16.mxu0 0
    %254 = vmatpush1.bf16.msra.mxu0 0
    %255 = vmatprep.subr.bf16.mxu0 0
    %256 = vmatpush1.bf16.msra.mxu0 0
    %257 = vmatprep.mubr.bf16.mxu0 0
    %258 = vmatmul.mubr.bf16.gmra.mrb[0].mxu0 %v153
    %v259 = vpop.f32.mrb[0].mxu0
    %v260 = vadd.f32 0.0, %v259
    %v261 = vpop.f32.mrb[0].mxu0
    %v262 = vpop.f32.mrb[0].mxu0
    %v263 = vadd.f32 0.0, %v262
    %v264 = vpop.f32.mrb[0].mxu0
    %265 = vmatprep.mubr.bf16.mxu0 0
    %266 = vmatmul.mubr.bf16.gmra.mrb[0].mxu0 %v154
    %v267 = vpop.f32.mrb[0].mxu0
    %v268 = vadd.f32 0.0, %v267
    %v269 = vpop.f32.mrb[0].mxu0
    %v270 = vpop.f32.mrb[0].mxu0
    %v271 = vadd.f32 0.0, %v270
    %v272 = vpop.f32.mrb[0].mxu0
    %273 = vmatprep.mubr.bf16.mxu0 0
    %274 = vmatmul.mubr.bf16.gmra.mrb[0].mxu0 %v155
    %v275 = vpop.f32.mrb[0].mxu0
    %v276 = vadd.f32 0.0, %v275
    %v277 = vpop.f32.mrb[0].mxu0
    %v278 = vpop.f32.mrb[0].mxu0
    %v279 = vadd.f32 0.0, %v278
    %v280 = vpop.f32.mrb[0].mxu0
    %281 = vmatprep.mubr.bf16.mxu0 0
    %282 = vmatmul.mubr.bf16.gmra.mrb[0].mxu0 %v156
    %v283 = vpop.f32.mrb[0].mxu0
    %v284 = vadd.f32 0.0, %v283
    %v285 = vpop.f32.mrb[0].mxu0
    %v286 = vpop.f32.mrb[0].mxu0
    %v287 = vadd.f32 0.0, %v286
    %v288 = vpop.f32.mrb[0].mxu0
    %289 = vmatprep.mubr.bf16.mxu0 0
    %290 = vmatmul.mubr.bf16.gmra.mrb[0].mxu0 %v157
    %v291 = vpop.f32.mrb[0].mxu0
    %v292 = vadd.f32 0.0, %v291
    %v293 = vpop.f32.mrb[0].mxu0
    %v294 = vpop.f32.mrb[0].mxu0
    %v295 = vadd.f32 0.0, %v294
    %v296 = vpop.f32.mrb[0].mxu0
    %297 = vmatprep.mubr.bf16.mxu0 0
    %298 = vmatmul.mubr.bf16.gmra.mrb[0].mxu0 %v158
    %v299 = vpop.f32.mrb[0].mxu0
    %v300 = vadd.f32 0.0, %v299
    %v301 = vpop.f32.mrb[0].mxu0
    %v302 = vpop.f32.mrb[0].mxu0
    %v303 = vadd.f32 0.0, %v302
    %v304 = vpop.f32.mrb[0].mxu0
    %305 = vmatprep.mubr.bf16.mxu0 0
    %306 = vmatmul.mubr.bf16.gmra.mrb[0].mxu0 %v159
    %v307 = vpop.f32.mrb[0].mxu0
    %v308 = vadd.f32 0.0, %v307
    %v309 = vpop.f32.mrb[0].mxu0
    %v310 = vpop.f32.mrb[0].mxu0
    %v311 = vadd.f32 0.0, %v310
    %v312 = vpop.f32.mrb[0].mxu0
    %313 = vmatprep.mubr.bf16.mxu0 0
    %314 = vmatmul.mubr.bf16.gmra.mrb[0].mxu0 %v160
    %v315 = vpop.f32.mrb[0].mxu0
    %v316 = vadd.f32 0.0, %v315
    %v317 = vpop.f32.mrb[0].mxu0
    %v318 = vpop.f32.mrb[0].mxu0
    %v319 = vadd.f32 0.0, %v318
    %v320 = vpop.f32.mrb[0].mxu0
    %321 = vdwg.mxu0
    %s322 = smul.u32 0, 128
    %v323 = vlaneseq
    %v324 = vshrl.u32 %v323, 7
    %v325 = vadd.s32 %v324, 8
    %v326 = vadd.s32 %v324, 16
    %v327 = vadd.s32 %v324, 24
    %v328 = vadd.s32 %v324, 32
    %v329 = vadd.s32 %v324, 40
    %v330 = vadd.s32 %v324, 48
    %v331 = vadd.s32 %v324, 56
    %v332 = vadd.s32 %v324, 64
    %v333 = vadd.s32 %v324, 72
    %v334 = vadd.s32 %v324, 80
    %v335 = vadd.s32 %v324, 88
    %v336 = vadd.s32 %v324, 96
    %v337 = vadd.s32 %v324, 104
    %v338 = vadd.s32 %v324, 112
    %v339 = vadd.s32 %v324, 120
    %v340 = vstv %s322
    %v341 = vadd.s32 %v340, %v324
    %v342 = vadd.s32 %v340, %v325
    %v343 = vadd.s32 %v340, %v326
    %v344 = vadd.s32 %v340, %v327
    %v345 = vadd.s32 %v340, %v328
    %v346 = vadd.s32 %v340, %v329
    %v347 = vadd.s32 %v340, %v330
    %v348 = vadd.s32 %v340, %v331
    %v349 = vadd.s32 %v340, %v332
    %v350 = vadd.s32 %v340, %v333
    %v351 = vadd.s32 %v340, %v334
    %v352 = vadd.s32 %v340, %v335
    %v353 = vadd.s32 %v340, %v336
    %v354 = vadd.s32 %v340, %v337
    %v355 = vadd.s32 %v340, %v338
    %v356 = vadd.s32 %v340, %v339
    %v357 = vlaneseq
    %v358 = vand.u32 %v357, 127
    %vm359 = vcmp.eq.s32.totalorder %v341, %v358
    %vm360 = vcmp.eq.s32.totalorder %v342, %v358
    %vm361 = vcmp.eq.s32.totalorder %v343, %v358
    %vm362 = vcmp.eq.s32.totalorder %v344, %v358
    %vm363 = vcmp.eq.s32.totalorder %v345, %v358
    %vm364 = vcmp.eq.s32.totalorder %v346, %v358
    %vm365 = vcmp.eq.s32.totalorder %v347, %v358
    %vm366 = vcmp.eq.s32.totalorder %v348, %v358
    %vm367 = vcmp.eq.s32.totalorder %v349, %v358
    %vm368 = vcmp.eq.s32.totalorder %v350, %v358
    %vm369 = vcmp.eq.s32.totalorder %v351, %v358
    %vm370 = vcmp.eq.s32.totalorder %v352, %v358
    %vm371 = vcmp.eq.s32.totalorder %v353, %v358
    %vm372 = vcmp.eq.s32.totalorder %v354, %v358
    %vm373 = vcmp.eq.s32.totalorder %v355, %v358
    %vm374 = vcmp.eq.s32.totalorder %v356, %v358
    %v375 = vsel %vm359, %v260, 0.0
    %v376 = vsel %vm360, %v263, 0.0
    %v377 = vsel %vm361, %v268, 0.0
    %v378 = vsel %vm362, %v271, 0.0
    %v379 = vsel %vm363, %v276, 0.0
    %v380 = vsel %vm364, %v279, 0.0
    %v381 = vsel %vm365, %v284, 0.0
    %v382 = vsel %vm366, %v287, 0.0
    %v383 = vsel %vm367, %v292, 0.0
    %v384 = vsel %vm368, %v295, 0.0
    %v385 = vsel %vm369, %v300, 0.0
    %v386 = vsel %vm370, %v303, 0.0
    %v387 = vsel %vm371, %v308, 0.0
    %v388 = vsel %vm372, %v311, 0.0
    %v389 = vsel %vm373, %v316, 0.0
    %v390 = vsel %vm374, %v319, 0.0
    %391 = vadd.xlane.f32.xlu0 %v375
    %v392 = vpop.xlane.xlu0 %391
    %393 = vadd.xlane.f32.xlu0 %v376
    %v394 = vpop.xlane.xlu0 %393
    %395 = vadd.xlane.f32.xlu0 %v377
    %v396 = vpop.xlane.xlu0 %395
    %397 = vadd.xlane.f32.xlu0 %v378
    %v398 = vpop.xlane.xlu0 %397
    %399 = vadd.xlane.f32.xlu0 %v379
    %v400 = vpop.xlane.xlu0 %399
    %401 = vadd.xlane.f32.xlu0 %v380
    %v402 = vpop.xlane.xlu0 %401
    %403 = vadd.xlane.f32.xlu0 %v381
    %v404 = vpop.xlane.xlu0 %403
    %405 = vadd.xlane.f32.xlu0 %v382
    %v406 = vpop.xlane.xlu0 %405
    %407 = vadd.xlane.f32.xlu0 %v383
    %v408 = vpop.xlane.xlu0 %407
    %409 = vadd.xlane.f32.xlu0 %v384
    %v410 = vpop.xlane.xlu0 %409
    %411 = vadd.xlane.f32.xlu0 %v385
    %v412 = vpop.xlane.xlu0 %411
    %413 = vadd.xlane.f32.xlu0 %v386
    %v414 = vpop.xlane.xlu0 %413
    %415 = vadd.xlane.f32.xlu0 %v387
    %v416 = vpop.xlane.xlu0 %415
    %417 = vadd.xlane.f32.xlu0 %v388
    %v418 = vpop.xlane.xlu0 %417
    %419 = vadd.xlane.f32.xlu0 %v389
    %v420 = vpop.xlane.xlu0 %419
    %421 = vadd.xlane.f32.xlu0 %v390
    %v422 = vpop.xlane.xlu0 %421
    %vm423 = vcmp.lt.s32.totalorder %v358, 2
    %v424 = vsel %vm423, %v260, -1e+30
    %v425 = vsel %vm423, %v263, -1e+30
    %v426 = vsel %vm423, %v268, -1e+30
    %v427 = vsel %vm423, %v271, -1e+30
    %v428 = vsel %vm423, %v276, -1e+30
    %v429 = vsel %vm423, %v279, -1e+30
    %v430 = vsel %vm423, %v284, -1e+30
    %v431 = vsel %vm423, %v287, -1e+30
    %v432 = vsel %vm423, %v292, -1e+30
    %v433 = vsel %vm423, %v295, -1e+30
    %v434 = vsel %vm423, %v300, -1e+30
    %v435 = vsel %vm423, %v303, -1e+30
    %v436 = vsel %vm423, %v308, -1e+30
    %v437 = vsel %vm423, %v311, -1e+30
    %v438 = vsel %vm423, %v316, -1e+30
    %v439 = vsel %vm423, %v319, -1e+30
    %440 = vmax.xlane.f32.xlu0 %v424
    %v441 = vpop.xlane.xlu0 %440
    %442 = vmax.xlane.f32.xlu0 %v425
    %v443 = vpop.xlane.xlu0 %442
    %444 = vmax.xlane.f32.xlu0 %v426
    %v445 = vpop.xlane.xlu0 %444
    %446 = vmax.xlane.f32.xlu0 %v427
    %v447 = vpop.xlane.xlu0 %446
    %448 = vmax.xlane.f32.xlu0 %v428
    %v449 = vpop.xlane.xlu0 %448
    %450 = vmax.xlane.f32.xlu0 %v429
    %v451 = vpop.xlane.xlu0 %450
    %452 = vmax.xlane.f32.xlu0 %v430
    %v453 = vpop.xlane.xlu0 %452
    %454 = vmax.xlane.f32.xlu0 %v431
    %v455 = vpop.xlane.xlu0 %454
    %456 = vmax.xlane.f32.xlu0 %v432
    %v457 = vpop.xlane.xlu0 %456
    %458 = vmax.xlane.f32.xlu0 %v433
    %v459 = vpop.xlane.xlu0 %458
    %460 = vmax.xlane.f32.xlu0 %v434
    %v461 = vpop.xlane.xlu0 %460
    %462 = vmax.xlane.f32.xlu0 %v435
    %v463 = vpop.xlane.xlu0 %462
    %464 = vmax.xlane.f32.xlu0 %v436
    %v465 = vpop.xlane.xlu0 %464
    %466 = vmax.xlane.f32.xlu0 %v437
    %v467 = vpop.xlane.xlu0 %466
    %468 = vmax.xlane.f32.xlu0 %v438
    %v469 = vpop.xlane.xlu0 %468
    %470 = vmax.xlane.f32.xlu0 %v439
    %v471 = vpop.xlane.xlu0 %470
    %v472 = vsub.f32 %v424, %v441
    %v473 = vsub.f32 %v425, %v443
    %v474 = vsub.f32 %v426, %v445
    %v475 = vsub.f32 %v427, %v447
    %v476 = vsub.f32 %v428, %v449
    %v477 = vsub.f32 %v429, %v451
    %v478 = vsub.f32 %v430, %v453
    %v479 = vsub.f32 %v431, %v455
    %v480 = vsub.f32 %v432, %v457
    %v481 = vsub.f32 %v433, %v459
    %v482 = vsub.f32 %v434, %v461
    %v483 = vsub.f32 %v435, %v463
    %v484 = vsub.f32 %v436, %v465
    %v485 = vsub.f32 %v437, %v467
    %v486 = vsub.f32 %v438, %v469
    %v487 = vsub.f32 %v439, %v471
    %v488 = vpack.c.bf16 %v473, %v472
    %v489 = vpack.c.bf16 %v475, %v474
    %v490 = vpack.c.bf16 %v477, %v476
    %v491 = vpack.c.bf16 %v479, %v478
    %v492 = vpack.c.bf16 %v481, %v480
    %v493 = vpack.c.bf16 %v483, %v482
    %v494 = vpack.c.bf16 %v485, %v484
    %v495 = vpack.c.bf16 %v487, %v486
    %v497 = vmul.bf16 %v488, 1069105081
    %v498 = vpow.bf16.pop %v497
    %v500 = vmul.bf16 %v489, 1069105081
    %v501 = vpow.bf16.pop %v500
    %v503 = vmul.bf16 %v490, 1069105081
    %v504 = vpow.bf16.pop %v503
    %v506 = vmul.bf16 %v491, 1069105081
    %v507 = vpow.bf16.pop %v506
    %v509 = vmul.bf16 %v492, 1069105081
    %v510 = vpow.bf16.pop %v509
    %v512 = vmul.bf16 %v493, 1069105081
    %v513 = vpow.bf16.pop %v512
    %v515 = vmul.bf16 %v494, 1069105081
    %v516 = vpow.bf16.pop %v515
    %v518 = vmul.bf16 %v495, 1069105081
    %v519 = vpow.bf16.pop %v518
    %v520 = vunpack.c.l.bf16 %v498
    %v521 = vunpack.c.h.bf16 %v498
    %v522 = vunpack.c.l.bf16 %v501
    %v523 = vunpack.c.h.bf16 %v501
    %v524 = vunpack.c.l.bf16 %v504
    %v525 = vunpack.c.h.bf16 %v504
    %v526 = vunpack.c.l.bf16 %v507
    %v527 = vunpack.c.h.bf16 %v507
    %v528 = vunpack.c.l.bf16 %v510
    %v529 = vunpack.c.h.bf16 %v510
    %v530 = vunpack.c.l.bf16 %v513
    %v531 = vunpack.c.h.bf16 %v513
    %v532 = vunpack.c.l.bf16 %v516
    %v533 = vunpack.c.h.bf16 %v516
    %v534 = vunpack.c.l.bf16 %v519
    %v535 = vunpack.c.h.bf16 %v519
    %536 = vadd.xlane.f32.xlu0 %v520
    %v537 = vpop.xlane.xlu0 %536
    %538 = vadd.xlane.f32.xlu0 %v521
    %v539 = vpop.xlane.xlu0 %538
    %540 = vadd.xlane.f32.xlu0 %v522
    %v541 = vpop.xlane.xlu0 %540
    %542 = vadd.xlane.f32.xlu0 %v523
    %v543 = vpop.xlane.xlu0 %542
    %544 = vadd.xlane.f32.xlu0 %v524
    %v545 = vpop.xlane.xlu0 %544
    %546 = vadd.xlane.f32.xlu0 %v525
    %v547 = vpop.xlane.xlu0 %546
    %548 = vadd.xlane.f32.xlu0 %v526
    %v549 = vpop.xlane.xlu0 %548
    %550 = vadd.xlane.f32.xlu0 %v527
    %v551 = vpop.xlane.xlu0 %550
    %552 = vadd.xlane.f32.xlu0 %v528
    %v553 = vpop.xlane.xlu0 %552
    %554 = vadd.xlane.f32.xlu0 %v529
    %v555 = vpop.xlane.xlu0 %554
    %556 = vadd.xlane.f32.xlu0 %v530
    %v557 = vpop.xlane.xlu0 %556
    %558 = vadd.xlane.f32.xlu0 %v531
    %v559 = vpop.xlane.xlu0 %558
    %560 = vadd.xlane.f32.xlu0 %v532
    %v561 = vpop.xlane.xlu0 %560
    %562 = vadd.xlane.f32.xlu0 %v533
    %v563 = vpop.xlane.xlu0 %562
    %564 = vadd.xlane.f32.xlu0 %v534
    %v565 = vpop.xlane.xlu0 %564
    %566 = vadd.xlane.f32.xlu0 %v535
    %v567 = vpop.xlane.xlu0 %566
    %v568 = vlog2.pop %v537
    %v569 = vmul.f32 %v568, 0.6931472
    %v570 = vlog2.pop %v539
    %v571 = vmul.f32 %v570, 0.6931472
    %v572 = vlog2.pop %v541
    %v573 = vmul.f32 %v572, 0.6931472
    %v574 = vlog2.pop %v543
    %v575 = vmul.f32 %v574, 0.6931472
    %v576 = vlog2.pop %v545
    %v577 = vmul.f32 %v576, 0.6931472
    %v578 = vlog2.pop %v547
    %v579 = vmul.f32 %v578, 0.6931472
    %v580 = vlog2.pop %v549
    %v581 = vmul.f32 %v580, 0.6931472
    %v582 = vlog2.pop %v551
    %v583 = vmul.f32 %v582, 0.6931472
    %v584 = vlog2.pop %v553
    %v585 = vmul.f32 %v584, 0.6931472
    %v586 = vlog2.pop %v555
    %v587 = vmul.f32 %v586, 0.6931472
    %v588 = vlog2.pop %v557
    %v589 = vmul.f32 %v588, 0.6931472
    %v590 = vlog2.pop %v559
    %v591 = vmul.f32 %v590, 0.6931472
    %v592 = vlog2.pop %v561
    %v593 = vmul.f32 %v592, 0.6931472
    %v594 = vlog2.pop %v563
    %v595 = vmul.f32 %v594, 0.6931472
    %v596 = vlog2.pop %v565
    %v597 = vmul.f32 %v596, 0.6931472
    %v598 = vlog2.pop %v567
    %v599 = vmul.f32 %v598, 0.6931472
    %v600 = vadd.f32 %v441, %v569
    %v601 = vadd.f32 %v443, %v571
    %v602 = vadd.f32 %v445, %v573
    %v603 = vadd.f32 %v447, %v575
    %v604 = vadd.f32 %v449, %v577
    %v605 = vadd.f32 %v451, %v579
    %v606 = vadd.f32 %v453, %v581
    %v607 = vadd.f32 %v455, %v583
    %v608 = vadd.f32 %v457, %v585
    %v609 = vadd.f32 %v459, %v587
    %v610 = vadd.f32 %v461, %v589
    %v611 = vadd.f32 %v463, %v591
    %v612 = vadd.f32 %v465, %v593
    %v613 = vadd.f32 %v467, %v595
    %v614 = vadd.f32 %v469, %v597
    %v615 = vadd.f32 %v471, %v599
    %v616 = vsub.f32 %v600, %v392
    %v617 = vsub.f32 %v601, %v394
    %v618 = vsub.f32 %v602, %v396
    %v619 = vsub.f32 %v603, %v398
    %v620 = vsub.f32 %v604, %v400
    %v621 = vsub.f32 %v605, %v402
    %v622 = vsub.f32 %v606, %v404
    %v623 = vsub.f32 %v607, %v406
    %v624 = vsub.f32 %v608, %v408
    %v625 = vsub.f32 %v609, %v410
    %v626 = vsub.f32 %v610, %v412
    %v627 = vsub.f32 %v611, %v414
    %v628 = vsub.f32 %v612, %v416
    %v629 = vsub.f32 %v613, %v418
    %v630 = vsub.f32 %v614, %v420
    %v631 = vsub.f32 %v615, %v422
    %vm632 = vcmp.lt.s32.totalorder %v341, 2
    %vm633 = vcmp.lt.s32.totalorder %v342, 2
    %vm634 = vcmp.lt.s32.totalorder %v343, 2
    %vm635 = vcmp.lt.s32.totalorder %v344, 2
    %vm636 = vcmp.lt.s32.totalorder %v345, 2
    %vm637 = vcmp.lt.s32.totalorder %v346, 2
    %vm638 = vcmp.lt.s32.totalorder %v347, 2
    %vm639 = vcmp.lt.s32.totalorder %v348, 2
    %vm640 = vcmp.lt.s32.totalorder %v349, 2
    %vm641 = vcmp.lt.s32.totalorder %v350, 2
    %vm642 = vcmp.lt.s32.totalorder %v351, 2
    %vm643 = vcmp.lt.s32.totalorder %v352, 2
    %vm644 = vcmp.lt.s32.totalorder %v353, 2
    %vm645 = vcmp.lt.s32.totalorder %v354, 2
    %vm646 = vcmp.lt.s32.totalorder %v355, 2
    %vm647 = vcmp.lt.s32.totalorder %v356, 2
    %v648 = vsel %vm632, %v616, 0.0
    %v649 = vsel %vm633, %v617, 0.0
    %v650 = vsel %vm634, %v618, 0.0
    %v651 = vsel %vm635, %v619, 0.0
    %v652 = vsel %vm636, %v620, 0.0
    %v653 = vsel %vm637, %v621, 0.0
    %v654 = vsel %vm638, %v622, 0.0
    %v655 = vsel %vm639, %v623, 0.0
    %v656 = vsel %vm640, %v624, 0.0
    %v657 = vsel %vm641, %v625, 0.0
    %v658 = vsel %vm642, %v626, 0.0
    %v659 = vsel %vm643, %v627, 0.0
    %v660 = vsel %vm644, %v628, 0.0
    %v661 = vsel %vm645, %v629, 0.0
    %v662 = vsel %vm646, %v630, 0.0
    %v663 = vsel %vm647, %v631, 0.0
    %v664 = vadd.f32 %v648, %v649
    %v665 = vadd.f32 %v664, %v650
    %v666 = vadd.f32 %v665, %v651
    %v667 = vadd.f32 %v666, %v652
    %v668 = vadd.f32 %v667, %v653
    %v669 = vadd.f32 %v668, %v654
    %v670 = vadd.f32 %v669, %v655
    %v671 = vadd.f32 %v670, %v656
    %v672 = vadd.f32 %v671, %v657
    %v673 = vadd.f32 %v672, %v658
    %v674 = vadd.f32 %v673, %v659
    %v675 = vadd.f32 %v674, %v660
    %v676 = vadd.f32 %v675, %v661
    %v677 = vadd.f32 %v676, %v662
    %v678 = vadd.f32 %v677, %v663
    %v679 = vrot.slane %v678, 4
    %v680 = vadd.f32 %v678, %v679
    %v681 = vrot.slane %v680, 2
    %v682 = vadd.f32 %v680, %v681
    %v683 = vrot.slane %v682, 1
    %v684 = vadd.f32 %v682, %v683
    %685 = vst [vmem:[#allocation7] sm:$0xff] %v684
    // Predicated region
    $region18: #{tpu_custom_call.1} parent=1 // pred_check
      _
    $region19: #{tpu_custom_call.1} parent=1 // pred_check_branch
      %687 = sbr.rel (0) target = $region21
    $region20: #{tpu_custom_call.1} parent=1 // pred_region
      %s689 = ssub.s32 128, 128
      %690 = vsyncadd [#allocation4], %s689
      %s692 = sshll.u32 [#allocation7], 4
      %s693 = int_to_ptr.vmem [resolvable:$true] %s692
      %695 = dma.vmem_to_hbm [thread:$0]  %s693, 128, %s2, [#allocation4]
    $region21: #{tpu_custom_call.1} parent=1 // pred_fallthru
      _
    // Predicated region
    $region22: #{tpu_custom_call.1} parent=1 // pred_check
      _
    $region23: #{tpu_custom_call.1} parent=1 // pred_check_branch
      %697 = sbr.rel (0) target = $region25
    $region24: #{tpu_custom_call.1} parent=1 // pred_region
      %698 = dma.done [#allocation4], 128
    $region25: #{tpu_custom_call.1} parent=1 // pred_fallthru
      _
    %699 = vsyncpa [#allocation3], 1
    %700 = vsyncpa [#allocation6], 1
    %701 = vsyncpa [#allocation4], 1

// kernel: tpu_custom_call.1
$region0: #{tpu_custom_call.1}
  #allocation0 [shape = 'u32[]', space=smem, size = 0x4, offset = 0x4, fixed_abs, tag = 'smem constant byte address 0x4 - core index']
  #allocation1 [shape = 'u32[144,128]{1,0:T(1,128)}', space=vmem, size = 0x12000, scoped, tag = 'internal scratch']
  %s0 = inlined_call_operand.hbm [shape: f32[128,128], index: 0, kind: input, shape index: {}]
  %s1 = inlined_call_operand.hbm [shape: bf16[128,128], index: 1, kind: input, shape index: {}]
  %s2 = inlined_call_operand.hbm [shape: f32[1,8,128], index: 2, kind: output, shape index: {}]
  %s3 = sld [smem:[#allocation0]]
  $region26: #{tpu_custom_call.1} parent=0
    _
  %s5 = ssub.s32 1, %s3
  %s6 = scalar_select 0, %s5, %s3
  $region1: #{tpu_custom_call.1} parent=0
    #allocation2 [shape = 'u8[65536]{0}', space=vmem, size = 0x10000, scoped, tag = 'input window, operand 0, single buffered']
    #allocation3 [shape = 's32[1]{0}', space=sflag, size = 0x4, scoped, tag = 'scoped memory for tpu_custom_call.1']
    #allocation4 [shape = 's32[1]{0}', space=sflag, size = 0x4, scoped, tag = 'scoped memory for tpu_custom_call.1']
    #allocation5 [shape = 'u8[32768]{0}', space=vmem, size = 0x8000, scoped, tag = 'input window, operand 1, single buffered']
    #allocation6 [shape = 's32[1]{0}', space=sflag, size = 0x4, scoped, tag = 'scoped memory for tpu_custom_call.1']
    #allocation7 [shape = 'u8[4096]{0}', space=vmem, size = 0x1000, scoped, tag = 'output window, operand 0, single buffered']
    %7 = vsyncpa [#allocation3], 0
    %8 = vsyncpa [#allocation6], 0
    %9 = vsyncpa [#allocation4], 0
    // Predicated region
    $region2: #{tpu_custom_call.1} parent=1 // pred_check
      _
    $region3: #{tpu_custom_call.1} parent=1 // pred_check_branch
      %11 = sbr.rel (0) target = $region5
    $region4: #{tpu_custom_call.1} parent=1 // pred_region
      %s13 = ssub.s32 2048, 2048
      %14 = vsyncadd [#allocation3], %s13
      %s15 = sshll.u32 [#allocation2], 4
      %s16 = int_to_ptr.vmem [resolvable:$true] %s15
      %21 = dma.hbm_to_vmem [thread:$0]  %s0, 2048, %s16, [#allocation3], 128, 128, 8
    $region5: #{tpu_custom_call.1} parent=1 // pred_fallthru
      _
    // Predicated region
    $region6: #{tpu_custom_call.1} parent=1 // pred_check
      _
    $region7: #{tpu_custom_call.1} parent=1 // pred_check_branch
      %23 = sbr.rel (0) target = $region9
    $region8: #{tpu_custom_call.1} parent=1 // pred_region
      %s25 = ssub.s32 1024, 1024
      %26 = vsyncadd [#allocation6], %s25
      %s27 = sshll.u32 [#allocation5], 4
      %s28 = int_to_ptr.vmem [resolvable:$true] %s27
      %33 = dma.hbm_to_vmem [thread:$0]  %s1, 1024, %s28, [#allocation6], 64, 64, 4
    $region9: #{tpu_custom_call.1} parent=1 // pred_fallthru
      _
    // Predicated region
    $region10: #{tpu_custom_call.1} parent=1 // pred_check
      _
    $region11: #{tpu_custom_call.1} parent=1 // pred_check_branch
      %35 = sbr.rel (0) target = $region13
    $region12: #{tpu_custom_call.1} parent=1 // pred_region
      %36 = dma.done [#allocation3], 2048
    $region13: #{tpu_custom_call.1} parent=1 // pred_fallthru
      _
    // Predicated region
    $region14: #{tpu_custom_call.1} parent=1 // pred_check
      _
    $region15: #{tpu_custom_call.1} parent=1 // pred_check_branch
      %38 = sbr.rel (0) target = $region17
    $region16: #{tpu_custom_call.1} parent=1 // pred_region
      %39 = dma.done [#allocation6], 1024
    $region17: #{tpu_custom_call.1} parent=1 // pred_fallthru
      _
    %v41 = vld [vmem:[#allocation2] sm:$0xff]
    %v42 = vld [vmem:[#allocation2 + $0x8] sm:$0xff]
    %v43 = vld [vmem:[#allocation2 + $0x10] sm:$0xff]
    %v44 = vld [vmem:[#allocation2 + $0x18] sm:$0xff]
    %v45 = vld [vmem:[#allocation2 + $0x20] sm:$0xff]
    %v46 = vld [vmem:[#allocation2 + $0x28] sm:$0xff]
    %v47 = vld [vmem:[#allocation2 + $0x30] sm:$0xff]
    %v48 = vld [vmem:[#allocation2 + $0x38] sm:$0xff]
    %v49 = vld [vmem:[#allocation2 + $0x40] sm:$0xff]
    %v50 = vld [vmem:[#allocation2 + $0x48] sm:$0xff]
    %v51 = vld [vmem:[#allocation2 + $0x50] sm:$0xff]
    %v52 = vld [vmem:[#allocation2 + $0x58] sm:$0xff]
    %v53 = vld [vmem:[#allocation2 + $0x60] sm:$0xff]
    %v54 = vld [vmem:[#allocation2 + $0x68] sm:$0xff]
    %v55 = vld [vmem:[#allocation2 + $0x70] sm:$0xff]
    %v56 = vld [vmem:[#allocation2 + $0x78] sm:$0xff]
    %v57 = vmul.f32 %v41, %v41
    %v58 = vmul.f32 %v42, %v42
    %v59 = vmul.f32 %v43, %v43
    %v60 = vmul.f32 %v44, %v44
    %v61 = vmul.f32 %v45, %v45
    %v62 = vmul.f32 %v46, %v46
    %v63 = vmul.f32 %v47, %v47
    %v64 = vmul.f32 %v48, %v48
    %v65 = vmul.f32 %v49, %v49
    %v66 = vmul.f32 %v50, %v50
    %v67 = vmul.f32 %v51, %v51
    %v68 = vmul.f32 %v52, %v52
    %v69 = vmul.f32 %v53, %v53
    %v70 = vmul.f32 %v54, %v54
    %v71 = vmul.f32 %v55, %v55
    %v72 = vmul.f32 %v56, %v56
    %73 = vadd.xlane.f32.xlu0 %v57
    %v74 = vpop.xlane.xlu0 %73
    %75 = vadd.xlane.f32.xlu0 %v58
    %v76 = vpop.xlane.xlu0 %75
    %77 = vadd.xlane.f32.xlu0 %v59
    %v78 = vpop.xlane.xlu0 %77
    %79 = vadd.xlane.f32.xlu0 %v60
    %v80 = vpop.xlane.xlu0 %79
    %81 = vadd.xlane.f32.xlu0 %v61
    %v82 = vpop.xlane.xlu0 %81
    %83 = vadd.xlane.f32.xlu0 %v62
    %v84 = vpop.xlane.xlu0 %83
    %85 = vadd.xlane.f32.xlu0 %v63
    %v86 = vpop.xlane.xlu0 %85
    %87 = vadd.xlane.f32.xlu0 %v64
    %v88 = vpop.xlane.xlu0 %87
    %89 = vadd.xlane.f32.xlu0 %v65
    %v90 = vpop.xlane.xlu0 %89
    %91 = vadd.xlane.f32.xlu0 %v66
    %v92 = vpop.xlane.xlu0 %91
    %93 = vadd.xlane.f32.xlu0 %v67
    %v94 = vpop.xlane.xlu0 %93
    %95 = vadd.xlane.f32.xlu0 %v68
    %v96 = vpop.xlane.xlu0 %95
    %97 = vadd.xlane.f32.xlu0 %v69
    %v98 = vpop.xlane.xlu0 %97
    %99 = vadd.xlane.f32.xlu0 %v70
    %v100 = vpop.xlane.xlu0 %99
    %101 = vadd.xlane.f32.xlu0 %v71
    %v102 = vpop.xlane.xlu0 %101
    %103 = vadd.xlane.f32.xlu0 %v72
    %v104 = vpop.xlane.xlu0 %103
    %v105 = vmax.f32 %v74, 1e-24
    %v106 = vmax.f32 %v76, 1e-24
    %v107 = vmax.f32 %v78, 1e-24
    %v108 = vmax.f32 %v80, 1e-24
    %v109 = vmax.f32 %v82, 1e-24
    %v110 = vmax.f32 %v84, 1e-24
    %v111 = vmax.f32 %v86, 1e-24
    %v112 = vmax.f32 %v88, 1e-24
    %v113 = vmax.f32 %v90, 1e-24
    %v114 = vmax.f32 %v92, 1e-24
    %v115 = vmax.f32 %v94, 1e-24
    %v116 = vmax.f32 %v96, 1e-24
    %v117 = vmax.f32 %v98, 1e-24
    %v118 = vmax.f32 %v100, 1e-24
    %v119 = vmax.f32 %v102, 1e-24
    %v120 = vmax.f32 %v104, 1e-24
    %v121 = vrsqrt.pop %v105
    %v122 = vrsqrt.pop %v106
    %v123 = vrsqrt.pop %v107
    %v124 = vrsqrt.pop %v108
    %v125 = vrsqrt.pop %v109
    %v126 = vrsqrt.pop %v110
    %v127 = vrsqrt.pop %v111
    %v128 = vrsqrt.pop %v112
    %v129 = vrsqrt.pop %v113
    %v130 = vrsqrt.pop %v114
    %v131 = vrsqrt.pop %v115
    %v132 = vrsqrt.pop %v116
    %v133 = vrsqrt.pop %v117
    %v134 = vrsqrt.pop %v118
    %v135 = vrsqrt.pop %v119
    %v136 = vrsqrt.pop %v120
    %v137 = vmul.f32 %v41, %v121
    %v138 = vmul.f32 %v42, %v122
    %v139 = vmul.f32 %v43, %v123
    %v140 = vmul.f32 %v44, %v124
    %v141 = vmul.f32 %v45, %v125
    %v142 = vmul.f32 %v46, %v126
    %v143 = vmul.f32 %v47, %v127
    %v144 = vmul.f32 %v48, %v128
    %v145 = vmul.f32 %v49, %v129
    %v146 = vmul.f32 %v50, %v130
    %v147 = vmul.f32 %v51, %v131
    %v148 = vmul.f32 %v52, %v132
    %v149 = vmul.f32 %v53, %v133
    %v150 = vmul.f32 %v54, %v134
    %v151 = vmul.f32 %v55, %v135
    %v152 = vmul.f32 %v56, %v136
    %v153 = vpack.c.bf16 %v138, %v137
    %v154 = vpack.c.bf16 %v140, %v139
    %v155 = vpack.c.bf16 %v142, %v141
    %v156 = vpack.c.bf16 %v144, %v143
    %v157 = vpack.c.bf16 %v146, %v145
    %v158 = vpack.c.bf16 %v148, %v147
    %v159 = vpack.c.bf16 %v150, %v149
    %v160 = vpack.c.bf16 %v152, %v151
    %v161 = vld [vmem:[#allocation5] sm:$0xf]
    %v162 = vld [vmem:[#allocation5 + $0x4] sm:$0xf]
    %v163 = vld [vmem:[#allocation5 + $0x8] sm:$0xf]
    %v164 = vld [vmem:[#allocation5 + $0xc] sm:$0xf]
    %v165 = vld [vmem:[#allocation5 + $0x10] sm:$0xf]
    %v166 = vld [vmem:[#allocation5 + $0x14] sm:$0xf]
    %v167 = vld [vmem:[#allocation5 + $0x18] sm:$0xf]
    %v168 = vld [vmem:[#allocation5 + $0x1c] sm:$0xf]
    %v169 = vld [vmem:[#allocation5 + $0x20] sm:$0xf]
    %v170 = vld [vmem:[#allocation5 + $0x24] sm:$0xf]
    %v171 = vld [vmem:[#allocation5 + $0x28] sm:$0xf]
    %v172 = vld [vmem:[#allocation5 + $0x2c] sm:$0xf]
    %v173 = vld [vmem:[#allocation5 + $0x30] sm:$0xf]
    %v174 = vld [vmem:[#allocation5 + $0x34] sm:$0xf]
    %v175 = vld [vmem:[#allocation5 + $0x38] sm:$0xf]
    %v176 = vld [vmem:[#allocation5 + $0x3c] sm:$0xf]
    %v193 = vunpack.c.l.b16 %v161
    %v194 = vunpack.c.l.b16 %v162
    %v195 = vunpack.c.l.b16 %v163
    %v196 = vunpack.c.l.b16 %v164
    %v197 = vunpack.c.l.b16 %v165
    %v198 = vunpack.c.l.b16 %v166
    %v199 = vunpack.c.l.b16 %v167
    %v200 = vunpack.c.l.b16 %v168
    %v201 = vunpack.c.l.b16 %v169
    %v202 = vunpack.c.l.b16 %v170
    %v203 = vunpack.c.l.b16 %v171
    %v204 = vunpack.c.l.b16 %v172
    %v205 = vunpack.c.l.b16 %v173
    %v206 = vunpack.c.l.b16 %v174
    %v207 = vunpack.c.l.b16 %v175
    %v208 = vunpack.c.l.b16 %v176
    %v209 = vpack.c.b16 %v194, %v193
    %v210 = vpack.c.b16 %v196, %v195
    %v211 = vpack.c.b16 %v198, %v197
    %v212 = vpack.c.b16 %v200, %v199
    %v213 = vpack.c.b16 %v202, %v201
    %v214 = vpack.c.b16 %v204, %v203
    %v215 = vpack.c.b16 %v206, %v205
    %v216 = vpack.c.b16 %v208, %v207
    %225 = vmatprep.subr.bf16.mxu0 0
    %226 = vmatpush1.bf16.msra.mxu0 %v209
    %227 = vmatprep.subr.bf16.mxu0 0
    %228 = vmatpush1.bf16.msra.mxu0 %v210
    %229 = vmatprep.subr.bf16.mxu0 0
    %230 = vmatpush1.bf16.msra.mxu0 %v211
    %231 = vmatprep.subr.bf16.mxu0 0
    %232 = vmatpush1.bf16.msra.mxu0 %v212
    %233 = vmatprep.subr.bf16.mxu0 0
    %234 = vmatpush1.bf16.msra.mxu0 %v213
    %235 = vmatprep.subr.bf16.mxu0 0
    %236 = vmatpush1.bf16.msra.mxu0 %v214
    %237 = vmatprep.subr.bf16.mxu0 0
    %238 = vmatpush1.bf16.msra.mxu0 %v215
    %239 = vmatprep.subr.bf16.mxu0 0
    %240 = vmatpush1.bf16.msra.mxu0 %v216
    %241 = vmatprep.subr.bf16.mxu0 0
    %242 = vmatpush1.bf16.msra.mxu0 0
    %243 = vmatprep.subr.bf16.mxu0 0
    %244 = vmatpush1.bf16.msra.mxu0 0
    %245 = vmatprep.subr.bf16.mxu0 0
    %246 = vmatpush1.bf16.msra.mxu0 0
    %247 = vmatprep.subr.bf16.mxu0 0
    %248 = vmatpush1.bf16.msra.mxu0 0
    %249 = vmatprep.subr.bf16.mxu0 0
    %250 = vmatpush1.bf16.msra.mxu0 0
    %251 = vmatprep.subr.bf16.mxu0 0
    %252 = vmatpush1.bf16.msra.mxu0 0
    %253 = vmatprep.subr.bf16.mxu0 0
    %254 = vmatpush1.bf16.msra.mxu0 0
    %255 = vmatprep.subr.bf16.mxu0 0
    %256 = vmatpush1.bf16.msra.mxu0 0
    %257 = vmatprep.mubr.bf16.mxu0 0
    %258 = vmatmul.mubr.bf16.gmra.mrb[0].mxu0 %v153
    %v259 = vpop.f32.mrb[0].mxu0
    %v260 = vadd.f32 0.0, %v259
    %v261 = vpop.f32.mrb[0].mxu0
    %v262 = vpop.f32.mrb[0].mxu0
    %v263 = vadd.f32 0.0, %v262
    %v264 = vpop.f32.mrb[0].mxu0
    %265 = vmatprep.mubr.bf16.mxu0 0
    %266 = vmatmul.mubr.bf16.gmra.mrb[0].mxu0 %v154
    %v267 = vpop.f32.mrb[0].mxu0
    %v268 = vadd.f32 0.0, %v267
    %v269 = vpop.f32.mrb[0].mxu0
    %v270 = vpop.f32.mrb[0].mxu0
    %v271 = vadd.f32 0.0, %v270
    %v272 = vpop.f32.mrb[0].mxu0
    %273 = vmatprep.mubr.bf16.mxu0 0
    %274 = vmatmul.mubr.bf16.gmra.mrb[0].mxu0 %v155
    %v275 = vpop.f32.mrb[0].mxu0
    %v276 = vadd.f32 0.0, %v275
    %v277 = vpop.f32.mrb[0].mxu0
    %v278 = vpop.f32.mrb[0].mxu0
    %v279 = vadd.f32 0.0, %v278
    %v280 = vpop.f32.mrb[0].mxu0
    %281 = vmatprep.mubr.bf16.mxu0 0
    %282 = vmatmul.mubr.bf16.gmra.mrb[0].mxu0 %v156
    %v283 = vpop.f32.mrb[0].mxu0
    %v284 = vadd.f32 0.0, %v283
    %v285 = vpop.f32.mrb[0].mxu0
    %v286 = vpop.f32.mrb[0].mxu0
    %v287 = vadd.f32 0.0, %v286
    %v288 = vpop.f32.mrb[0].mxu0
    %289 = vmatprep.mubr.bf16.mxu0 0
    %290 = vmatmul.mubr.bf16.gmra.mrb[0].mxu0 %v157
    %v291 = vpop.f32.mrb[0].mxu0
    %v292 = vadd.f32 0.0, %v291
    %v293 = vpop.f32.mrb[0].mxu0
    %v294 = vpop.f32.mrb[0].mxu0
    %v295 = vadd.f32 0.0, %v294
    %v296 = vpop.f32.mrb[0].mxu0
    %297 = vmatprep.mubr.bf16.mxu0 0
    %298 = vmatmul.mubr.bf16.gmra.mrb[0].mxu0 %v158
    %v299 = vpop.f32.mrb[0].mxu0
    %v300 = vadd.f32 0.0, %v299
    %v301 = vpop.f32.mrb[0].mxu0
    %v302 = vpop.f32.mrb[0].mxu0
    %v303 = vadd.f32 0.0, %v302
    %v304 = vpop.f32.mrb[0].mxu0
    %305 = vmatprep.mubr.bf16.mxu0 0
    %306 = vmatmul.mubr.bf16.gmra.mrb[0].mxu0 %v159
    %v307 = vpop.f32.mrb[0].mxu0
    %v308 = vadd.f32 0.0, %v307
    %v309 = vpop.f32.mrb[0].mxu0
    %v310 = vpop.f32.mrb[0].mxu0
    %v311 = vadd.f32 0.0, %v310
    %v312 = vpop.f32.mrb[0].mxu0
    %313 = vmatprep.mubr.bf16.mxu0 0
    %314 = vmatmul.mubr.bf16.gmra.mrb[0].mxu0 %v160
    %v315 = vpop.f32.mrb[0].mxu0
    %v316 = vadd.f32 0.0, %v315
    %v317 = vpop.f32.mrb[0].mxu0
    %v318 = vpop.f32.mrb[0].mxu0
    %v319 = vadd.f32 0.0, %v318
    %v320 = vpop.f32.mrb[0].mxu0
    %321 = vdwg.mxu0
    %s322 = smul.u32 0, 128
    %v323 = vlaneseq
    %v324 = vshrl.u32 %v323, 7
    %v325 = vadd.s32 %v324, 8
    %v326 = vadd.s32 %v324, 16
    %v327 = vadd.s32 %v324, 24
    %v328 = vadd.s32 %v324, 32
    %v329 = vadd.s32 %v324, 40
    %v330 = vadd.s32 %v324, 48
    %v331 = vadd.s32 %v324, 56
    %v332 = vadd.s32 %v324, 64
    %v333 = vadd.s32 %v324, 72
    %v334 = vadd.s32 %v324, 80
    %v335 = vadd.s32 %v324, 88
    %v336 = vadd.s32 %v324, 96
    %v337 = vadd.s32 %v324, 104
    %v338 = vadd.s32 %v324, 112
    %v339 = vadd.s32 %v324, 120
    %v340 = vstv %s322
    %v341 = vadd.s32 %v340, %v324
    %v342 = vadd.s32 %v340, %v325
    %v343 = vadd.s32 %v340, %v326
    %v344 = vadd.s32 %v340, %v327
    %v345 = vadd.s32 %v340, %v328
    %v346 = vadd.s32 %v340, %v329
    %v347 = vadd.s32 %v340, %v330
    %v348 = vadd.s32 %v340, %v331
    %v349 = vadd.s32 %v340, %v332
    %v350 = vadd.s32 %v340, %v333
    %v351 = vadd.s32 %v340, %v334
    %v352 = vadd.s32 %v340, %v335
    %v353 = vadd.s32 %v340, %v336
    %v354 = vadd.s32 %v340, %v337
    %v355 = vadd.s32 %v340, %v338
    %v356 = vadd.s32 %v340, %v339
    %v357 = vlaneseq
    %v358 = vand.u32 %v357, 127
    %vm359 = vcmp.eq.s32.totalorder %v341, %v358
    %vm360 = vcmp.eq.s32.totalorder %v342, %v358
    %vm361 = vcmp.eq.s32.totalorder %v343, %v358
    %vm362 = vcmp.eq.s32.totalorder %v344, %v358
    %vm363 = vcmp.eq.s32.totalorder %v345, %v358
    %vm364 = vcmp.eq.s32.totalorder %v346, %v358
    %vm365 = vcmp.eq.s32.totalorder %v347, %v358
    %vm366 = vcmp.eq.s32.totalorder %v348, %v358
    %vm367 = vcmp.eq.s32.totalorder %v349, %v358
    %vm368 = vcmp.eq.s32.totalorder %v350, %v358
    %vm369 = vcmp.eq.s32.totalorder %v351, %v358
    %vm370 = vcmp.eq.s32.totalorder %v352, %v358
    %vm371 = vcmp.eq.s32.totalorder %v353, %v358
    %vm372 = vcmp.eq.s32.totalorder %v354, %v358
    %vm373 = vcmp.eq.s32.totalorder %v355, %v358
    %vm374 = vcmp.eq.s32.totalorder %v356, %v358
    %v375 = vsel %vm359, %v260, 0.0
    %v376 = vsel %vm360, %v263, 0.0
    %v377 = vsel %vm361, %v268, 0.0
    %v378 = vsel %vm362, %v271, 0.0
    %v379 = vsel %vm363, %v276, 0.0
    %v380 = vsel %vm364, %v279, 0.0
    %v381 = vsel %vm365, %v284, 0.0
    %v382 = vsel %vm366, %v287, 0.0
    %v383 = vsel %vm367, %v292, 0.0
    %v384 = vsel %vm368, %v295, 0.0
    %v385 = vsel %vm369, %v300, 0.0
    %v386 = vsel %vm370, %v303, 0.0
    %v387 = vsel %vm371, %v308, 0.0
    %v388 = vsel %vm372, %v311, 0.0
    %v389 = vsel %vm373, %v316, 0.0
    %v390 = vsel %vm374, %v319, 0.0
    %391 = vadd.xlane.f32.xlu0 %v375
    %v392 = vpop.xlane.xlu0 %391
    %393 = vadd.xlane.f32.xlu0 %v376
    %v394 = vpop.xlane.xlu0 %393
    %395 = vadd.xlane.f32.xlu0 %v377
    %v396 = vpop.xlane.xlu0 %395
    %397 = vadd.xlane.f32.xlu0 %v378
    %v398 = vpop.xlane.xlu0 %397
    %399 = vadd.xlane.f32.xlu0 %v379
    %v400 = vpop.xlane.xlu0 %399
    %401 = vadd.xlane.f32.xlu0 %v380
    %v402 = vpop.xlane.xlu0 %401
    %403 = vadd.xlane.f32.xlu0 %v381
    %v404 = vpop.xlane.xlu0 %403
    %405 = vadd.xlane.f32.xlu0 %v382
    %v406 = vpop.xlane.xlu0 %405
    %407 = vadd.xlane.f32.xlu0 %v383
    %v408 = vpop.xlane.xlu0 %407
    %409 = vadd.xlane.f32.xlu0 %v384
    %v410 = vpop.xlane.xlu0 %409
    %411 = vadd.xlane.f32.xlu0 %v385
    %v412 = vpop.xlane.xlu0 %411
    %413 = vadd.xlane.f32.xlu0 %v386
    %v414 = vpop.xlane.xlu0 %413
    %415 = vadd.xlane.f32.xlu0 %v387
    %v416 = vpop.xlane.xlu0 %415
    %417 = vadd.xlane.f32.xlu0 %v388
    %v418 = vpop.xlane.xlu0 %417
    %419 = vadd.xlane.f32.xlu0 %v389
    %v420 = vpop.xlane.xlu0 %419
    %421 = vadd.xlane.f32.xlu0 %v390
    %v422 = vpop.xlane.xlu0 %421
    %vm423 = vcmp.lt.s32.totalorder %v358, 2
    %v424 = vsel %vm423, %v260, -1e+30
    %v425 = vsel %vm423, %v263, -1e+30
    %v426 = vsel %vm423, %v268, -1e+30
    %v427 = vsel %vm423, %v271, -1e+30
    %v428 = vsel %vm423, %v276, -1e+30
    %v429 = vsel %vm423, %v279, -1e+30
    %v430 = vsel %vm423, %v284, -1e+30
    %v431 = vsel %vm423, %v287, -1e+30
    %v432 = vsel %vm423, %v292, -1e+30
    %v433 = vsel %vm423, %v295, -1e+30
    %v434 = vsel %vm423, %v300, -1e+30
    %v435 = vsel %vm423, %v303, -1e+30
    %v436 = vsel %vm423, %v308, -1e+30
    %v437 = vsel %vm423, %v311, -1e+30
    %v438 = vsel %vm423, %v316, -1e+30
    %v439 = vsel %vm423, %v319, -1e+30
    %440 = vmax.xlane.f32.xlu0 %v424
    %v441 = vpop.xlane.xlu0 %440
    %442 = vmax.xlane.f32.xlu0 %v425
    %v443 = vpop.xlane.xlu0 %442
    %444 = vmax.xlane.f32.xlu0 %v426
    %v445 = vpop.xlane.xlu0 %444
    %446 = vmax.xlane.f32.xlu0 %v427
    %v447 = vpop.xlane.xlu0 %446
    %448 = vmax.xlane.f32.xlu0 %v428
    %v449 = vpop.xlane.xlu0 %448
    %450 = vmax.xlane.f32.xlu0 %v429
    %v451 = vpop.xlane.xlu0 %450
    %452 = vmax.xlane.f32.xlu0 %v430
    %v453 = vpop.xlane.xlu0 %452
    %454 = vmax.xlane.f32.xlu0 %v431
    %v455 = vpop.xlane.xlu0 %454
    %456 = vmax.xlane.f32.xlu0 %v432
    %v457 = vpop.xlane.xlu0 %456
    %458 = vmax.xlane.f32.xlu0 %v433
    %v459 = vpop.xlane.xlu0 %458
    %460 = vmax.xlane.f32.xlu0 %v434
    %v461 = vpop.xlane.xlu0 %460
    %462 = vmax.xlane.f32.xlu0 %v435
    %v463 = vpop.xlane.xlu0 %462
    %464 = vmax.xlane.f32.xlu0 %v436
    %v465 = vpop.xlane.xlu0 %464
    %466 = vmax.xlane.f32.xlu0 %v437
    %v467 = vpop.xlane.xlu0 %466
    %468 = vmax.xlane.f32.xlu0 %v438
    %v469 = vpop.xlane.xlu0 %468
    %470 = vmax.xlane.f32.xlu0 %v439
    %v471 = vpop.xlane.xlu0 %470
    %v472 = vsub.f32 %v424, %v441
    %v473 = vsub.f32 %v425, %v443
    %v474 = vsub.f32 %v426, %v445
    %v475 = vsub.f32 %v427, %v447
    %v476 = vsub.f32 %v428, %v449
    %v477 = vsub.f32 %v429, %v451
    %v478 = vsub.f32 %v430, %v453
    %v479 = vsub.f32 %v431, %v455
    %v480 = vsub.f32 %v432, %v457
    %v481 = vsub.f32 %v433, %v459
    %v482 = vsub.f32 %v434, %v461
    %v483 = vsub.f32 %v435, %v463
    %v484 = vsub.f32 %v436, %v465
    %v485 = vsub.f32 %v437, %v467
    %v486 = vsub.f32 %v438, %v469
    %v487 = vsub.f32 %v439, %v471
    %v488 = vpack.c.bf16 %v473, %v472
    %v489 = vpack.c.bf16 %v475, %v474
    %v490 = vpack.c.bf16 %v477, %v476
    %v491 = vpack.c.bf16 %v479, %v478
    %v492 = vpack.c.bf16 %v481, %v480
    %v493 = vpack.c.bf16 %v483, %v482
    %v494 = vpack.c.bf16 %v485, %v484
    %v495 = vpack.c.bf16 %v487, %v486
    %v497 = vmul.bf16 %v488, 1069105081
    %v498 = vpow.bf16.pop %v497
    %v500 = vmul.bf16 %v489, 1069105081
    %v501 = vpow.bf16.pop %v500
    %v503 = vmul.bf16 %v490, 1069105081
    %v504 = vpow.bf16.pop %v503
    %v506 = vmul.bf16 %v491, 1069105081
    %v507 = vpow.bf16.pop %v506
    %v509 = vmul.bf16 %v492, 1069105081
    %v510 = vpow.bf16.pop %v509
    %v512 = vmul.bf16 %v493, 1069105081
    %v513 = vpow.bf16.pop %v512
    %v515 = vmul.bf16 %v494, 1069105081
    %v516 = vpow.bf16.pop %v515
    %v518 = vmul.bf16 %v495, 1069105081
    %v519 = vpow.bf16.pop %v518
    %v520 = vunpack.c.l.bf16 %v498
    %v521 = vunpack.c.h.bf16 %v498
    %v522 = vunpack.c.l.bf16 %v501
    %v523 = vunpack.c.h.bf16 %v501
    %v524 = vunpack.c.l.bf16 %v504
    %v525 = vunpack.c.h.bf16 %v504
    %v526 = vunpack.c.l.bf16 %v507
    %v527 = vunpack.c.h.bf16 %v507
    %v528 = vunpack.c.l.bf16 %v510
    %v529 = vunpack.c.h.bf16 %v510
    %v530 = vunpack.c.l.bf16 %v513
    %v531 = vunpack.c.h.bf16 %v513
    %v532 = vunpack.c.l.bf16 %v516
    %v533 = vunpack.c.h.bf16 %v516
    %v534 = vunpack.c.l.bf16 %v519
    %v535 = vunpack.c.h.bf16 %v519
    %536 = vadd.xlane.f32.xlu0 %v520
    %v537 = vpop.xlane.xlu0 %536
    %538 = vadd.xlane.f32.xlu0 %v521
    %v539 = vpop.xlane.xlu0 %538
    %540 = vadd.xlane.f32.xlu0 %v522
    %v541 = vpop.xlane.xlu0 %540
    %542 = vadd.xlane.f32.xlu0 %v523
    %v543 = vpop.xlane.xlu0 %542
    %544 = vadd.xlane.f32.xlu0 %v524
    %v545 = vpop.xlane.xlu0 %544
    %546 = vadd.xlane.f32.xlu0 %v525
    %v547 = vpop.xlane.xlu0 %546
    %548 = vadd.xlane.f32.xlu0 %v526
    %v549 = vpop.xlane.xlu0 %548
    %550 = vadd.xlane.f32.xlu0 %v527
    %v551 = vpop.xlane.xlu0 %550
    %552 = vadd.xlane.f32.xlu0 %v528
    %v553 = vpop.xlane.xlu0 %552
    %554 = vadd.xlane.f32.xlu0 %v529
    %v555 = vpop.xlane.xlu0 %554
    %556 = vadd.xlane.f32.xlu0 %v530
    %v557 = vpop.xlane.xlu0 %556
    %558 = vadd.xlane.f32.xlu0 %v531
    %v559 = vpop.xlane.xlu0 %558
    %560 = vadd.xlane.f32.xlu0 %v532
    %v561 = vpop.xlane.xlu0 %560
    %562 = vadd.xlane.f32.xlu0 %v533
    %v563 = vpop.xlane.xlu0 %562
    %564 = vadd.xlane.f32.xlu0 %v534
    %v565 = vpop.xlane.xlu0 %564
    %566 = vadd.xlane.f32.xlu0 %v535
    %v567 = vpop.xlane.xlu0 %566
    %v568 = vlog2.pop %v537
    %v569 = vmul.f32 %v568, 0.6931472
    %v570 = vlog2.pop %v539
    %v571 = vmul.f32 %v570, 0.6931472
    %v572 = vlog2.pop %v541
    %v573 = vmul.f32 %v572, 0.6931472
    %v574 = vlog2.pop %v543
    %v575 = vmul.f32 %v574, 0.6931472
    %v576 = vlog2.pop %v545
    %v577 = vmul.f32 %v576, 0.6931472
    %v578 = vlog2.pop %v547
    %v579 = vmul.f32 %v578, 0.6931472
    %v580 = vlog2.pop %v549
    %v581 = vmul.f32 %v580, 0.6931472
    %v582 = vlog2.pop %v551
    %v583 = vmul.f32 %v582, 0.6931472
    %v584 = vlog2.pop %v553
    %v585 = vmul.f32 %v584, 0.6931472
    %v586 = vlog2.pop %v555
    %v587 = vmul.f32 %v586, 0.6931472
    %v588 = vlog2.pop %v557
    %v589 = vmul.f32 %v588, 0.6931472
    %v590 = vlog2.pop %v559
    %v591 = vmul.f32 %v590, 0.6931472
    %v592 = vlog2.pop %v561
    %v593 = vmul.f32 %v592, 0.6931472
    %v594 = vlog2.pop %v563
    %v595 = vmul.f32 %v594, 0.6931472
    %v596 = vlog2.pop %v565
    %v597 = vmul.f32 %v596, 0.6931472
    %v598 = vlog2.pop %v567
    %v599 = vmul.f32 %v598, 0.6931472
    %v600 = vadd.f32 %v441, %v569
    %v601 = vadd.f32 %v443, %v571
    %v602 = vadd.f32 %v445, %v573
    %v603 = vadd.f32 %v447, %v575
    %v604 = vadd.f32 %v449, %v577
    %v605 = vadd.f32 %v451, %v579
    %v606 = vadd.f32 %v453, %v581
    %v607 = vadd.f32 %v455, %v583
    %v608 = vadd.f32 %v457, %v585
    %v609 = vadd.f32 %v459, %v587
    %v610 = vadd.f32 %v461, %v589
    %v611 = vadd.f32 %v463, %v591
    %v612 = vadd.f32 %v465, %v593
    %v613 = vadd.f32 %v467, %v595
    %v614 = vadd.f32 %v469, %v597
    %v615 = vadd.f32 %v471, %v599
    %v616 = vsub.f32 %v600, %v392
    %v617 = vsub.f32 %v601, %v394
    %v618 = vsub.f32 %v602, %v396
    %v619 = vsub.f32 %v603, %v398
    %v620 = vsub.f32 %v604, %v400
    %v621 = vsub.f32 %v605, %v402
    %v622 = vsub.f32 %v606, %v404
    %v623 = vsub.f32 %v607, %v406
    %v624 = vsub.f32 %v608, %v408
    %v625 = vsub.f32 %v609, %v410
    %v626 = vsub.f32 %v610, %v412
    %v627 = vsub.f32 %v611, %v414
    %v628 = vsub.f32 %v612, %v416
    %v629 = vsub.f32 %v613, %v418
    %v630 = vsub.f32 %v614, %v420
    %v631 = vsub.f32 %v615, %v422
    %vm632 = vcmp.lt.s32.totalorder %v341, 2
    %vm633 = vcmp.lt.s32.totalorder %v342, 2
    %vm634 = vcmp.lt.s32.totalorder %v343, 2
    %vm635 = vcmp.lt.s32.totalorder %v344, 2
    %vm636 = vcmp.lt.s32.totalorder %v345, 2
    %vm637 = vcmp.lt.s32.totalorder %v346, 2
    %vm638 = vcmp.lt.s32.totalorder %v347, 2
    %vm639 = vcmp.lt.s32.totalorder %v348, 2
    %vm640 = vcmp.lt.s32.totalorder %v349, 2
    %vm641 = vcmp.lt.s32.totalorder %v350, 2
    %vm642 = vcmp.lt.s32.totalorder %v351, 2
    %vm643 = vcmp.lt.s32.totalorder %v352, 2
    %vm644 = vcmp.lt.s32.totalorder %v353, 2
    %vm645 = vcmp.lt.s32.totalorder %v354, 2
    %vm646 = vcmp.lt.s32.totalorder %v355, 2
    %vm647 = vcmp.lt.s32.totalorder %v356, 2
    %v648 = vsel %vm632, %v616, 0.0
    %v649 = vsel %vm633, %v617, 0.0
    %v650 = vsel %vm634, %v618, 0.0
    %v651 = vsel %vm635, %v619, 0.0
    %v652 = vsel %vm636, %v620, 0.0
    %v653 = vsel %vm637, %v621, 0.0
    %v654 = vsel %vm638, %v622, 0.0
    %v655 = vsel %vm639, %v623, 0.0
    %v656 = vsel %vm640, %v624, 0.0
    %v657 = vsel %vm641, %v625, 0.0
    %v658 = vsel %vm642, %v626, 0.0
    %v659 = vsel %vm643, %v627, 0.0
    %v660 = vsel %vm644, %v628, 0.0
    %v661 = vsel %vm645, %v629, 0.0
    %v662 = vsel %vm646, %v630, 0.0
    %v663 = vsel %vm647, %v631, 0.0
    %v664 = vadd.f32 %v648, %v649
    %v665 = vadd.f32 %v664, %v650
    %v666 = vadd.f32 %v665, %v651
    %v667 = vadd.f32 %v666, %v652
    %v668 = vadd.f32 %v667, %v653
    %v669 = vadd.f32 %v668, %v654
    %v670 = vadd.f32 %v669, %v655
    %v671 = vadd.f32 %v670, %v656
    %v672 = vadd.f32 %v671, %v657
    %v673 = vadd.f32 %v672, %v658
    %v674 = vadd.f32 %v673, %v659
    %v675 = vadd.f32 %v674, %v660
    %v676 = vadd.f32 %v675, %v661
    %v677 = vadd.f32 %v676, %v662
    %v678 = vadd.f32 %v677, %v663
    %v679 = vrot.slane %v678, 4
    %v680 = vadd.f32 %v678, %v679
    %v681 = vrot.slane %v680, 2
    %v682 = vadd.f32 %v680, %v681
    %v683 = vrot.slane %v682, 1
    %v684 = vadd.f32 %v682, %v683
    %685 = vst [vmem:[#allocation7] sm:$0xff] %v684
    // Predicated region
    $region18: #{tpu_custom_call.1} parent=1 // pred_check
      _
    $region19: #{tpu_custom_call.1} parent=1 // pred_check_branch
      %687 = sbr.rel (0) target = $region21
    $region20: #{tpu_custom_call.1} parent=1 // pred_region
      %s689 = ssub.s32 128, 128
      %690 = vsyncadd [#allocation4], %s689
      %s692 = sshll.u32 [#allocation7], 4
      %s693 = int_to_ptr.vmem [resolvable:$true] %s692
      %695 = dma.vmem_to_hbm [thread:$0]  %s693, 128, %s2, [#allocation4]
    $region21: #{tpu_custom_call.1} parent=1 // pred_fallthru
      _
    // Predicated region
    $region22: #{tpu_custom_call.1} parent=1 // pred_check
      _
    $region23: #{tpu_custom_call.1} parent=1 // pred_check_branch
      %697 = sbr.rel (0) target = $region25
    $region24: #{tpu_custom_call.1} parent=1 // pred_region
      %698 = dma.done [#allocation4], 128
    $region25: #{tpu_custom_call.1} parent=1 // pred_fallthru
      _
    %699 = vsyncpa [#allocation3], 1
    %700 = vsyncpa [#allocation6], 1
    %701 = vsyncpa [#allocation4], 1

</llo_original>
